<compile_context>
chip_gen: v6e
topology: v6e:2x2x1
jax: 0.10.0
libtpu: 0.0.40
codegen_flags: <defaults>
</compile_context>

<pallas_src>
import functools

import jax
import jax.numpy as jnp
from jax.experimental import pallas as pl
from jax.experimental.pallas import tpu as pltpu

# ----------------------------- problem sizes --------------------------------
BATCH = 2
T_Q = 8          # num_tokens_q
T_KV = 8         # num_tokens_kv
EMBED_DIM = 32
NUM_HEADS = 4
HEAD_DIM = EMBED_DIM // NUM_HEADS
LN_EPS = 1e-5


# ------------------------------- kernel -------------------------------------
def _attention_block_kernel(num_heads, head_dim, q_ref, k_ref, v_ref, p_ref, o_ref):
    """Inputs:
         q_ref: (B, Tq,  E)   raw query tokens
         k_ref: (B, Tkv, E)   raw key tokens
         v_ref: (B, Tkv, E)   raw value tokens
         p_ref: (E+2, 4E)     packed params (see module docstring)
       Output:
         o_ref: (B, Tq, E)
    """
    B, Tq, E = q_ref.shape
    Tkv = k_ref.shape[1]
    H, D = num_heads, head_dim

    # --- unpack parameter slab (static slices -> zero-cost views) ------------
    ln_w = p_ref[E:E + 1, 0:E]             # (1, E)
    ln_b = p_ref[E:E + 1, E:2 * E]         # (1, E)
    b_out = p_ref[E:E + 1, 2 * E:3 * E]    # (1, E)
    b_q = p_ref[E + 1:E + 2, 0:E]          # (1, E)
    b_k = p_ref[E + 1:E + 2, E:2 * E]      # (1, E)
    b_v = p_ref[E + 1:E + 2, 2 * E:3 * E]  # (1, E)

    def layer_norm(x):                     # x: (B, T, E) f32
        mu = jnp.mean(x, axis=-1, keepdims=True)
        xc = x - mu
        var = jnp.mean(xc * xc, axis=-1, keepdims=True)
        return xc * jax.lax.rsqrt(var + LN_EPS) * ln_w + ln_b

    xq = q_ref[...].astype(jnp.float32)                       # kept for residual
    nq = layer_norm(xq).reshape(B * Tq, E)
    nk = layer_norm(k_ref[...].astype(jnp.float32)).reshape(B * Tkv, E)
    nv = layer_norm(v_ref[...].astype(jnp.float32)).reshape(B * Tkv, E)

    # --- Q/K/V projections (PyTorch Linear: y = x @ W^T + b) -----------------
    scale = 1.0 / (D ** 0.5)
    qp = (jnp.dot(nq, p_ref[0:E, 0:E],
                  preferred_element_type=jnp.float32) + b_q) * scale
    kp = jnp.dot(nk, p_ref[0:E, E:2 * E],
                 preferred_element_type=jnp.float32) + b_k
    vp = jnp.dot(nv, p_ref[0:E, 2 * E:3 * E],
                 preferred_element_type=jnp.float32) + b_v
    qp = qp.reshape(B, Tq, E)
    kp = kp.reshape(B, Tkv, E)
    vp = vp.reshape(B, Tkv, E)

    # --- heads -> leading batch dim: (B, T, H*D) -> (H*B, T, D) ---------------
    def split_heads(p):
        return jnp.concatenate(
            [p[:, :, h * D:(h + 1) * D] for h in range(H)], axis=0)

    qh = split_heads(qp)                                      # (H*B, Tq, D)
    kh = split_heads(kp)                                      # (H*B, Tkv, D)
    vh = split_heads(vp)                                      # (H*B, Tkv, D)

    # --- batched scaled-dot-product attention (two batched MXU einsums) ------
    s = jnp.einsum('bqd,bkd->bqk', qh, kh,
                   preferred_element_type=jnp.float32)        # (H*B, Tq, Tkv)
    s = s - jnp.max(s, axis=-1, keepdims=True)
    p = jnp.exp(s)
    p = p * pl.reciprocal(jnp.sum(p, axis=-1, keepdims=True), approx=True)
    o = jnp.einsum('bqk,bkd->bqd', p, vh,
                   preferred_element_type=jnp.float32)        # (H*B, Tq, D)

    # --- merge heads back onto the embedding (lane) axis ----------------------
    o = o.reshape(H, B, Tq, D)                                # leading split (free)
    attn = jnp.concatenate([o[h] for h in range(H)], axis=-1)  # (B, Tq, E)

    # --- output projection + residual with the *un-normalized* query ----------
    out = jnp.dot(attn.reshape(B * Tq, E), p_ref[0:E, 3 * E:4 * E],
                  preferred_element_type=jnp.float32) + b_out
    o_ref[...] = (out.reshape(B, Tq, E) + xq).astype(o_ref.dtype)


# ------------------------------- wrapper -------------------------------------
def pack_params(params):
    """Pack all module parameters into one lane-dense (E+2, 4E) f32 slab.

    Done once, outside the hot path (in real use this would be precomputed).
    """
    E = params["ln_w"].shape[0]
    zeros = jnp.zeros((E,), jnp.float32)
    w = jnp.concatenate([params["in_proj_w"].T, params["out_proj_w"].T],
                        axis=1).astype(jnp.float32)           # (E, 4E)
    row0 = jnp.concatenate([params["ln_w"], params["ln_b"],
                            params["out_proj_b"], zeros])     # (4E,)
    row1 = jnp.concatenate([params["in_proj_b"], zeros])      # (4E,)
    return jnp.concatenate(
        [w, row0[None, :].astype(jnp.float32), row1[None, :].astype(jnp.float32)],
        axis=0)                                               # (E+2, 4E)


@jax.jit
def attention_block(input_q, input_k, input_v, packed_params):
    B, Tq, E = input_q.shape
    kernel = functools.partial(_attention_block_kernel, NUM_HEADS, HEAD_DIM)

    def vmem():
        return pl.BlockSpec(memory_space=pltpu.MemorySpace.VMEM)

    # Single grid-less invocation: all (tiny) operands live in VMEM.
    return pl.pallas_call(
        kernel,
        out_shape=jax.ShapeDtypeStruct((B, Tq, E), input_q.dtype),
        in_specs=[vmem(), vmem(), vmem(), vmem()],
        out_specs=vmem(),
    )(input_q, input_k, input_v, packed_params)


# --------------------------- pure-JAX reference -------------------------------
def attention_block_ref(input_q, input_k, input_v, params):
    E = input_q.shape[-1]
    H, D = NUM_HEADS, HEAD_DIM

    def ln(x):
        mu = jnp.mean(x, axis=-1, keepdims=True)
        var = jnp.mean((x - mu) ** 2, axis=-1, keepdims=True)
        return (x - mu) / jnp.sqrt(var + LN_EPS) * params["ln_w"] + params["ln_b"]

    nq, nk, nv = ln(input_q), ln(input_k), ln(input_v)
    wq, wk, wv = (params["in_proj_w"][:E], params["in_proj_w"][E:2 * E],
                  params["in_proj_w"][2 * E:])
    bq, bk, bv = (params["in_proj_b"][:E], params["in_proj_b"][E:2 * E],
                  params["in_proj_b"][2 * E:])

    qp = nq @ wq.T + bq
    kp = nk @ wk.T + bk
    vp = nv @ wv.T + bv

    B, Tq, _ = qp.shape
    Tkv = kp.shape[1]
    qh = qp.reshape(B, Tq, H, D).transpose(0, 2, 1, 3)
    kh = kp.reshape(B, Tkv, H, D).transpose(0, 2, 1, 3)
    vh = vp.reshape(B, Tkv, H, D).transpose(0, 2, 1, 3)

    s = jnp.einsum("bhqd,bhkd->bhqk", qh, kh) / jnp.sqrt(D)
    p = jax.nn.softmax(s, axis=-1)
    o = jnp.einsum("bhqk,bhkd->bhqd", p, vh)
    o = o.transpose(0, 2, 1, 3).reshape(B, Tq, E)
    o = o @ params["out_proj_w"].T + params["out_proj_b"]
    return input_q + o


# --------------------------------- main ---------------------------------------
if __name__ == "__main__":
    key = jax.random.PRNGKey(0)
    keys = jax.random.split(key, 8)

    input_q = jax.random.normal(keys[0], (BATCH, T_Q, EMBED_DIM), jnp.float32)
    input_k = jax.random.normal(keys[1], (BATCH, T_KV, EMBED_DIM), jnp.float32)
    input_v = jax.random.normal(keys[2], (BATCH, T_KV, EMBED_DIM), jnp.float32)

    params = {
        "ln_w": jnp.ones((EMBED_DIM,), jnp.float32)
                + 0.01 * jax.random.normal(keys[3], (EMBED_DIM,), jnp.float32),
        "ln_b": 0.01 * jax.random.normal(keys[4], (EMBED_DIM,), jnp.float32),
        "in_proj_w": 0.05 * jax.random.normal(
            keys[5], (3 * EMBED_DIM, EMBED_DIM), jnp.float32),
        "in_proj_b": 0.01 * jax.random.normal(
            keys[6], (3 * EMBED_DIM,), jnp.float32),
        "out_proj_w": 0.05 * jax.random.normal(
            keys[7], (EMBED_DIM, EMBED_DIM), jnp.float32),
        "out_proj_b": jnp.zeros((EMBED_DIM,), jnp.float32),
    }

    packed = pack_params(params)                      # one-time param packing
    out = attention_block(input_q, input_k, input_v, packed)
    out = jax.block_until_ready(out)

    ref = attention_block_ref(input_q, input_k, input_v, params)
    assert out.shape == (BATCH, T_Q, EMBED_DIM)
    # Tolerance accounts for the EUP approximate reciprocal in the softmax denom.
    assert jnp.allclose(out, ref, atol=2e-3, rtol=2e-3), (
        f"max abs err: {jnp.max(jnp.abs(out - ref))}")

    print("KERNEL_OK")
</pallas_src>

<mosaic_0001>
module attributes {stable_mosaic.version = 11 : i64} {
  func.func @_attention_block_kernel(%arg0: memref<2x8x32xf32, #tpu.memory_space<vmem>>, %arg1: memref<2x8x32xf32, #tpu.memory_space<vmem>>, %arg2: memref<2x8x32xf32, #tpu.memory_space<vmem>>, %arg3: memref<34x128xf32, #tpu.memory_space<vmem>>, %arg4: memref<2x8x32xf32, #tpu.memory_space<vmem>>) attributes {dimension_semantics = [], scalar_prefetch = 0 : i64, scratch_operands = 0 : i64, tpu.core_type = #tpu.core_type<tc>} {
    %c32 = arith.constant 32 : index
    %c0 = arith.constant 0 : index
    %0 = vector.load %arg3[%c32, %c0] : memref<34x128xf32, #tpu.memory_space<vmem>>, vector<1x32xf32>
    %c32_0 = arith.constant 32 : index
    %c32_1 = arith.constant 32 : index
    %1 = vector.load %arg3[%c32_0, %c32_1] : memref<34x128xf32, #tpu.memory_space<vmem>>, vector<1x32xf32>
    %c32_2 = arith.constant 32 : index
    %c64 = arith.constant 64 : index
    %2 = vector.load %arg3[%c32_2, %c64] : memref<34x128xf32, #tpu.memory_space<vmem>>, vector<1x32xf32>
    %c33 = arith.constant 33 : index
    %c0_3 = arith.constant 0 : index
    %3 = vector.load %arg3[%c33, %c0_3] : memref<34x128xf32, #tpu.memory_space<vmem>>, vector<1x32xf32>
    %c33_4 = arith.constant 33 : index
    %c32_5 = arith.constant 32 : index
    %4 = vector.load %arg3[%c33_4, %c32_5] : memref<34x128xf32, #tpu.memory_space<vmem>>, vector<1x32xf32>
    %c33_6 = arith.constant 33 : index
    %c64_7 = arith.constant 64 : index
    %5 = vector.load %arg3[%c33_6, %c64_7] : memref<34x128xf32, #tpu.memory_space<vmem>>, vector<1x32xf32>
    %c0_8 = arith.constant 0 : index
    %c0_9 = arith.constant 0 : index
    %c0_10 = arith.constant 0 : index
    %6 = vector.load %arg0[%c0_8, %c0_9, %c0_10] : memref<2x8x32xf32, #tpu.memory_space<vmem>>, vector<2x8x32xf32>
    %cst = arith.constant dense<0.000000e+00> : vector<2x8xf32>
    %7 = vector.multi_reduction <add>, %6, %cst [2] : vector<2x8x32xf32> to vector<2x8xf32>
    %8 = vector.shape_cast %7 : vector<2x8xf32> to vector<2x8x1xf32>
    %cst_11 = arith.constant 3.200000e+01 : f32
    %9 = vector.broadcast %cst_11 : f32 to vector<2x8x1xf32>
    %10 = arith.divf %8, %9 : vector<2x8x1xf32>
    %11 = vector.broadcast %10 : vector<2x8x1xf32> to vector<2x8x32xf32>
    %12 = arith.subf %6, %11 : vector<2x8x32xf32>
    %13 = arith.mulf %12, %12 : vector<2x8x32xf32>
    %cst_12 = arith.constant dense<0.000000e+00> : vector<2x8xf32>
    %14 = vector.multi_reduction <add>, %13, %cst_12 [2] : vector<2x8x32xf32> to vector<2x8xf32>
    %15 = vector.shape_cast %14 : vector<2x8xf32> to vector<2x8x1xf32>
    %cst_13 = arith.constant 3.200000e+01 : f32
    %16 = vector.broadcast %cst_13 : f32 to vector<2x8x1xf32>
    %17 = arith.divf %15, %16 : vector<2x8x1xf32>
    %cst_14 = arith.constant 9.99999974E-6 : f32
    %18 = vector.broadcast %cst_14 : f32 to vector<2x8x1xf32>
    %19 = arith.addf %17, %18 : vector<2x8x1xf32>
    %20 = math.rsqrt %19 : vector<2x8x1xf32>
    %21 = vector.broadcast %20 : vector<2x8x1xf32> to vector<2x8x32xf32>
    %22 = arith.mulf %12, %21 : vector<2x8x32xf32>
    %23 = vector.shape_cast %0 : vector<1x32xf32> to vector<1x1x32xf32>
    %24 = vector.broadcast %23 : vector<1x1x32xf32> to vector<2x8x32xf32>
    %25 = arith.mulf %22, %24 : vector<2x8x32xf32>
    %26 = vector.shape_cast %1 : vector<1x32xf32> to vector<1x1x32xf32>
    %27 = vector.broadcast %26 : vector<1x1x32xf32> to vector<2x8x32xf32>
    %28 = arith.addf %25, %27 : vector<2x8x32xf32>
    %29 = vector.shape_cast %28 : vector<2x8x32xf32> to vector<16x32xf32>
    %c0_15 = arith.constant 0 : index
    %c0_16 = arith.constant 0 : index
    %c0_17 = arith.constant 0 : index
    %30 = vector.load %arg1[%c0_15, %c0_16, %c0_17] : memref<2x8x32xf32, #tpu.memory_space<vmem>>, vector<2x8x32xf32>
    %cst_18 = arith.constant dense<0.000000e+00> : vector<2x8xf32>
    %31 = vector.multi_reduction <add>, %30, %cst_18 [2] : vector<2x8x32xf32> to vector<2x8xf32>
    %32 = vector.shape_cast %31 : vector<2x8xf32> to vector<2x8x1xf32>
    %cst_19 = arith.constant 3.200000e+01 : f32
    %33 = vector.broadcast %cst_19 : f32 to vector<2x8x1xf32>
    %34 = arith.divf %32, %33 : vector<2x8x1xf32>
    %35 = vector.broadcast %34 : vector<2x8x1xf32> to vector<2x8x32xf32>
    %36 = arith.subf %30, %35 : vector<2x8x32xf32>
    %37 = arith.mulf %36, %36 : vector<2x8x32xf32>
    %cst_20 = arith.constant dense<0.000000e+00> : vector<2x8xf32>
    %38 = vector.multi_reduction <add>, %37, %cst_20 [2] : vector<2x8x32xf32> to vector<2x8xf32>
    %39 = vector.shape_cast %38 : vector<2x8xf32> to vector<2x8x1xf32>
    %cst_21 = arith.constant 3.200000e+01 : f32
    %40 = vector.broadcast %cst_21 : f32 to vector<2x8x1xf32>
    %41 = arith.divf %39, %40 : vector<2x8x1xf32>
    %cst_22 = arith.constant 9.99999974E-6 : f32
    %42 = vector.broadcast %cst_22 : f32 to vector<2x8x1xf32>
    %43 = arith.addf %41, %42 : vector<2x8x1xf32>
    %44 = math.rsqrt %43 : vector<2x8x1xf32>
    %45 = vector.broadcast %44 : vector<2x8x1xf32> to vector<2x8x32xf32>
    %46 = arith.mulf %36, %45 : vector<2x8x32xf32>
    %47 = vector.shape_cast %0 : vector<1x32xf32> to vector<1x1x32xf32>
    %48 = vector.broadcast %47 : vector<1x1x32xf32> to vector<2x8x32xf32>
    %49 = arith.mulf %46, %48 : vector<2x8x32xf32>
    %50 = vector.shape_cast %1 : vector<1x32xf32> to vector<1x1x32xf32>
    %51 = vector.broadcast %50 : vector<1x1x32xf32> to vector<2x8x32xf32>
    %52 = arith.addf %49, %51 : vector<2x8x32xf32>
    %53 = vector.shape_cast %52 : vector<2x8x32xf32> to vector<16x32xf32>
    %c0_23 = arith.constant 0 : index
    %c0_24 = arith.constant 0 : index
    %c0_25 = arith.constant 0 : index
    %54 = vector.load %arg2[%c0_23, %c0_24, %c0_25] : memref<2x8x32xf32, #tpu.memory_space<vmem>>, vector<2x8x32xf32>
    %cst_26 = arith.constant dense<0.000000e+00> : vector<2x8xf32>
    %55 = vector.multi_reduction <add>, %54, %cst_26 [2] : vector<2x8x32xf32> to vector<2x8xf32>
    %56 = vector.shape_cast %55 : vector<2x8xf32> to vector<2x8x1xf32>
    %cst_27 = arith.constant 3.200000e+01 : f32
    %57 = vector.broadcast %cst_27 : f32 to vector<2x8x1xf32>
    %58 = arith.divf %56, %57 : vector<2x8x1xf32>
    %59 = vector.broadcast %58 : vector<2x8x1xf32> to vector<2x8x32xf32>
    %60 = arith.subf %54, %59 : vector<2x8x32xf32>
    %61 = arith.mulf %60, %60 : vector<2x8x32xf32>
    %cst_28 = arith.constant dense<0.000000e+00> : vector<2x8xf32>
    %62 = vector.multi_reduction <add>, %61, %cst_28 [2] : vector<2x8x32xf32> to vector<2x8xf32>
    %63 = vector.shape_cast %62 : vector<2x8xf32> to vector<2x8x1xf32>
    %cst_29 = arith.constant 3.200000e+01 : f32
    %64 = vector.broadcast %cst_29 : f32 to vector<2x8x1xf32>
    %65 = arith.divf %63, %64 : vector<2x8x1xf32>
    %cst_30 = arith.constant 9.99999974E-6 : f32
    %66 = vector.broadcast %cst_30 : f32 to vector<2x8x1xf32>
    %67 = arith.addf %65, %66 : vector<2x8x1xf32>
    %68 = math.rsqrt %67 : vector<2x8x1xf32>
    %69 = vector.broadcast %68 : vector<2x8x1xf32> to vector<2x8x32xf32>
    %70 = arith.mulf %60, %69 : vector<2x8x32xf32>
    %71 = vector.shape_cast %0 : vector<1x32xf32> to vector<1x1x32xf32>
    %72 = vector.broadcast %71 : vector<1x1x32xf32> to vector<2x8x32xf32>
    %73 = arith.mulf %70, %72 : vector<2x8x32xf32>
    %74 = vector.shape_cast %1 : vector<1x32xf32> to vector<1x1x32xf32>
    %75 = vector.broadcast %74 : vector<1x1x32xf32> to vector<2x8x32xf32>
    %76 = arith.addf %73, %75 : vector<2x8x32xf32>
    %77 = vector.shape_cast %76 : vector<2x8x32xf32> to vector<16x32xf32>
    %c0_31 = arith.constant 0 : index
    %c0_32 = arith.constant 0 : index
    %78 = vector.load %arg3[%c0_31, %c0_32] : memref<34x128xf32, #tpu.memory_space<vmem>>, vector<32x32xf32>
    %cst_33 = arith.constant dense<0.000000e+00> : vector<16x32xf32>
    %79 = tpu.matmul %29, %78, %cst_33 {dimension_numbers = #tpu.dot_dimension_numbers<[1], [0], [0], [1], [0, 0, 1, 1], [], []>} : vector<16x32xf32>, vector<32x32xf32>, vector<16x32xf32> -> vector<16x32xf32>
    %80 = vector.broadcast %3 : vector<1x32xf32> to vector<16x32xf32>
    %81 = arith.addf %79, %80 : vector<16x32xf32>
    %cst_34 = arith.constant 0.353553385 : f32
    %82 = vector.broadcast %cst_34 : f32 to vector<16x32xf32>
    %83 = arith.mulf %81, %82 : vector<16x32xf32>
    %c0_35 = arith.constant 0 : index
    %c32_36 = arith.constant 32 : index
    %84 = vector.load %arg3[%c0_35, %c32_36] : memref<34x128xf32, #tpu.memory_space<vmem>>, vector<32x32xf32>
    %cst_37 = arith.constant dense<0.000000e+00> : vector<16x32xf32>
    %85 = tpu.matmul %53, %84, %cst_37 {dimension_numbers = #tpu.dot_dimension_numbers<[1], [0], [0], [1], [0, 0, 1, 1], [], []>} : vector<16x32xf32>, vector<32x32xf32>, vector<16x32xf32> -> vector<16x32xf32>
    %86 = vector.broadcast %4 : vector<1x32xf32> to vector<16x32xf32>
    %87 = arith.addf %85, %86 : vector<16x32xf32>
    %c0_38 = arith.constant 0 : index
    %c64_39 = arith.constant 64 : index
    %88 = vector.load %arg3[%c0_38, %c64_39] : memref<34x128xf32, #tpu.memory_space<vmem>>, vector<32x32xf32>
    %cst_40 = arith.constant dense<0.000000e+00> : vector<16x32xf32>
    %89 = tpu.matmul %77, %88, %cst_40 {dimension_numbers = #tpu.dot_dimension_numbers<[1], [0], [0], [1], [0, 0, 1, 1], [], []>} : vector<16x32xf32>, vector<32x32xf32>, vector<16x32xf32> -> vector<16x32xf32>
    %90 = vector.broadcast %5 : vector<1x32xf32> to vector<16x32xf32>
    %91 = arith.addf %89, %90 : vector<16x32xf32>
    %92 = vector.shape_cast %83 : vector<16x32xf32> to vector<2x8x32xf32>
    %93 = vector.shape_cast %87 : vector<16x32xf32> to vector<2x8x32xf32>
    %94 = vector.shape_cast %91 : vector<16x32xf32> to vector<2x8x32xf32>
    %95 = vector.extract_strided_slice %92 {offsets = [0, 0, 0], sizes = [2, 8, 8], strides = [1, 1, 1]} : vector<2x8x32xf32> to vector<2x8x8xf32>
    %96 = vector.extract_strided_slice %92 {offsets = [0, 0, 8], sizes = [2, 8, 8], strides = [1, 1, 1]} : vector<2x8x32xf32> to vector<2x8x8xf32>
    %97 = vector.extract_strided_slice %92 {offsets = [0, 0, 16], sizes = [2, 8, 8], strides = [1, 1, 1]} : vector<2x8x32xf32> to vector<2x8x8xf32>
    %98 = vector.extract_strided_slice %92 {offsets = [0, 0, 24], sizes = [2, 8, 8], strides = [1, 1, 1]} : vector<2x8x32xf32> to vector<2x8x8xf32>
    %99 = tpu.concatenate %95, %96, %97, %98 in 0 : vector<2x8x8xf32>, vector<2x8x8xf32>, vector<2x8x8xf32>, vector<2x8x8xf32> -> vector<8x8x8xf32>
    %100 = vector.extract_strided_slice %93 {offsets = [0, 0, 0], sizes = [2, 8, 8], strides = [1, 1, 1]} : vector<2x8x32xf32> to vector<2x8x8xf32>
    %101 = vector.extract_strided_slice %93 {offsets = [0, 0, 8], sizes = [2, 8, 8], strides = [1, 1, 1]} : vector<2x8x32xf32> to vector<2x8x8xf32>
    %102 = vector.extract_strided_slice %93 {offsets = [0, 0, 16], sizes = [2, 8, 8], strides = [1, 1, 1]} : vector<2x8x32xf32> to vector<2x8x8xf32>
    %103 = vector.extract_strided_slice %93 {offsets = [0, 0, 24], sizes = [2, 8, 8], strides = [1, 1, 1]} : vector<2x8x32xf32> to vector<2x8x8xf32>
    %104 = tpu.concatenate %100, %101, %102, %103 in 0 : vector<2x8x8xf32>, vector<2x8x8xf32>, vector<2x8x8xf32>, vector<2x8x8xf32> -> vector<8x8x8xf32>
    %105 = vector.extract_strided_slice %94 {offsets = [0, 0, 0], sizes = [2, 8, 8], strides = [1, 1, 1]} : vector<2x8x32xf32> to vector<2x8x8xf32>
    %106 = vector.extract_strided_slice %94 {offsets = [0, 0, 8], sizes = [2, 8, 8], strides = [1, 1, 1]} : vector<2x8x32xf32> to vector<2x8x8xf32>
    %107 = vector.extract_strided_slice %94 {offsets = [0, 0, 16], sizes = [2, 8, 8], strides = [1, 1, 1]} : vector<2x8x32xf32> to vector<2x8x8xf32>
    %108 = vector.extract_strided_slice %94 {offsets = [0, 0, 24], sizes = [2, 8, 8], strides = [1, 1, 1]} : vector<2x8x32xf32> to vector<2x8x8xf32>
    %109 = tpu.concatenate %105, %106, %107, %108 in 0 : vector<2x8x8xf32>, vector<2x8x8xf32>, vector<2x8x8xf32>, vector<2x8x8xf32> -> vector<8x8x8xf32>
    "tpu.trace_start"() <{level = 10 : i32, message = "bqd,bkd->bqk"}> : () -> ()
    %cst_41 = arith.constant dense<0.000000e+00> : vector<8x8x8xf32>
    %110 = tpu.matmul %99, %104, %cst_41 {dimension_numbers = #tpu.dot_dimension_numbers<[2], [2], [1], [1], [0, 0, 0, 1, 1, 1], [0], [0]>} : vector<8x8x8xf32>, vector<8x8x8xf32>, vector<8x8x8xf32> -> vector<8x8x8xf32>
    "tpu.trace_stop"() : () -> ()
    %cst_42 = arith.constant dense<0xFF800000> : vector<8x8xf32>
    %111 = vector.multi_reduction <maximumf>, %110, %cst_42 [2] : vector<8x8x8xf32> to vector<8x8xf32>
    %112 = vector.shape_cast %111 : vector<8x8xf32> to vector<8x8x1xf32>
    %113 = vector.broadcast %112 : vector<8x8x1xf32> to vector<8x8x8xf32>
    %114 = arith.subf %110, %113 : vector<8x8x8xf32>
    %115 = math.exp %114 : vector<8x8x8xf32>
    %cst_43 = arith.constant dense<0.000000e+00> : vector<8x8xf32>
    %116 = vector.multi_reduction <add>, %115, %cst_43 [2] : vector<8x8x8xf32> to vector<8x8xf32>
    %117 = vector.shape_cast %116 : vector<8x8xf32> to vector<8x8x1xf32>
    %118 = tpu.reciprocal %117 {approx = true} : vector<8x8x1xf32> -> vector<8x8x1xf32>
    %119 = vector.broadcast %118 : vector<8x8x1xf32> to vector<8x8x8xf32>
    %120 = arith.mulf %115, %119 : vector<8x8x8xf32>
    "tpu.trace_start"() <{level = 10 : i32, message = "bqk,bkd->bqd"}> : () -> ()
    %cst_44 = arith.constant dense<0.000000e+00> : vector<8x8x8xf32>
    %121 = tpu.matmul %120, %109, %cst_44 {dimension_numbers = #tpu.dot_dimension_numbers<[2], [1], [1], [2], [0, 0, 0, 1, 1, 2], [0], [0]>} : vector<8x8x8xf32>, vector<8x8x8xf32>, vector<8x8x8xf32> -> vector<8x8x8xf32>
    "tpu.trace_stop"() : () -> ()
    %122 = vector.shape_cast %121 : vector<8x8x8xf32> to vector<4x2x8x8xf32>
    %123 = vector.extract_strided_slice %122 {offsets = [0, 0, 0, 0], sizes = [1, 2, 8, 8], strides = [1, 1, 1, 1]} : vector<4x2x8x8xf32> to vector<1x2x8x8xf32>
    %124 = vector.shape_cast %123 : vector<1x2x8x8xf32> to vector<2x8x8xf32>
    %125 = vector.extract_strided_slice %122 {offsets = [1, 0, 0, 0], sizes = [1, 2, 8, 8], strides = [1, 1, 1, 1]} : vector<4x2x8x8xf32> to vector<1x2x8x8xf32>
    %126 = vector.shape_cast %125 : vector<1x2x8x8xf32> to vector<2x8x8xf32>
    %127 = vector.extract_strided_slice %122 {offsets = [2, 0, 0, 0], sizes = [1, 2, 8, 8], strides = [1, 1, 1, 1]} : vector<4x2x8x8xf32> to vector<1x2x8x8xf32>
    %128 = vector.shape_cast %127 : vector<1x2x8x8xf32> to vector<2x8x8xf32>
    %129 = vector.extract_strided_slice %122 {offsets = [3, 0, 0, 0], sizes = [1, 2, 8, 8], strides = [1, 1, 1, 1]} : vector<4x2x8x8xf32> to vector<1x2x8x8xf32>
    %130 = vector.shape_cast %129 : vector<1x2x8x8xf32> to vector<2x8x8xf32>
    %131 = tpu.concatenate %124, %126, %128, %130 in 2 : vector<2x8x8xf32>, vector<2x8x8xf32>, vector<2x8x8xf32>, vector<2x8x8xf32> -> vector<2x8x32xf32>
    %132 = vector.shape_cast %131 : vector<2x8x32xf32> to vector<16x32xf32>
    %c0_45 = arith.constant 0 : index
    %c96 = arith.constant 96 : index
    %133 = vector.load %arg3[%c0_45, %c96] : memref<34x128xf32, #tpu.memory_space<vmem>>, vector<32x32xf32>
    %cst_46 = arith.constant dense<0.000000e+00> : vector<16x32xf32>
    %134 = tpu.matmul %132, %133, %cst_46 {dimension_numbers = #tpu.dot_dimension_numbers<[1], [0], [0], [1], [0, 0, 1, 1], [], []>} : vector<16x32xf32>, vector<32x32xf32>, vector<16x32xf32> -> vector<16x32xf32>
    %135 = vector.broadcast %2 : vector<1x32xf32> to vector<16x32xf32>
    %136 = arith.addf %134, %135 : vector<16x32xf32>
    %137 = vector.shape_cast %136 : vector<16x32xf32> to vector<2x8x32xf32>
    %138 = arith.addf %137, %6 : vector<2x8x32xf32>
    %c0_47 = arith.constant 0 : index
    %c0_48 = arith.constant 0 : index
    %c0_49 = arith.constant 0 : index
    %139 = vector.load %arg4[%c0_47, %c0_48, %c0_49] : memref<2x8x32xf32, #tpu.memory_space<vmem>>, vector<2x8x32xf32>
    tpu.vector_store %arg4[%c0_47, %c0_48, %c0_49], %138 {strides = array<i32>} : memref<2x8x32xf32, #tpu.memory_space<vmem>>, vector<2x8x32xf32>,
    return
  }
}

</mosaic_0001>

<llo_original>
// kernel: attention_block.1
$region0: #{attention_block.1}
  #allocation0 [shape = 'u32[]', space=smem, size = 0x4, offset = 0x4, fixed_abs, tag = 'smem constant byte address 0x4 - core index']
  #allocation1 [shape = 'u32[144,128]{1,0:T(1,128)}', space=vmem, size = 0x12000, scoped, tag = 'internal scratch']
  %s0 = inlined_call_operand.hbm [shape: f32[2,8,32], index: 0, kind: input, shape index: {}]
  %s1 = inlined_call_operand.hbm [shape: f32[2,8,32], index: 1, kind: input, shape index: {}]
  %s2 = inlined_call_operand.hbm [shape: f32[2,8,32], index: 2, kind: input, shape index: {}]
  %s3 = inlined_call_operand.hbm [shape: f32[34,128], index: 3, kind: input, shape index: {}]
  %s4 = inlined_call_operand.hbm [shape: f32[2,8,32], index: 4, kind: output, shape index: {}]
  %s5 = sld [smem:[#allocation0]]
  $region42: #{attention_block.1} parent=0
    _
  %s7 = ssub.s32 1, %s5
  %s8 = scalar_select 0, %s7, %s5
  $region1: #{attention_block.1} parent=0
    #allocation2 [shape = 'u8[8192]{0}', space=vmem, size = 0x2000, scoped, tag = 'input window, operand 0, single buffered']
    #allocation3 [shape = 's32[1]{0}', space=sflag, size = 0x4, scoped, tag = 'scoped memory for attention_block.1']
    #allocation4 [shape = 's32[1]{0}', space=sflag, size = 0x4, scoped, tag = 'scoped memory for attention_block.1']
    #allocation5 [shape = 'u8[8192]{0}', space=vmem, size = 0x2000, scoped, tag = 'input window, operand 1, single buffered']
    #allocation6 [shape = 's32[1]{0}', space=sflag, size = 0x4, scoped, tag = 'scoped memory for attention_block.1']
    #allocation7 [shape = 'u8[8192]{0}', space=vmem, size = 0x2000, scoped, tag = 'input window, operand 2, single buffered']
    #allocation8 [shape = 'u8[20480]{0}', space=vmem, size = 0x5000, scoped, tag = 'input window, operand 3, single buffered']
    #allocation9 [shape = 's32[1]{0}', space=sflag, size = 0x4, scoped, tag = 'scoped memory for attention_block.1']
    #allocation10 [shape = 'u8[8192]{0}', space=vmem, size = 0x2000, scoped, tag = 'output window, operand 0, single buffered']
    %9 = vsyncpa [#allocation3], 0
    %10 = vsyncpa [#allocation6], 0
    %11 = vsyncpa [#allocation9], 0
    %12 = vsyncpa [#allocation4], 0
    // Predicated region
    $region2: #{attention_block.1} parent=1 // pred_check
      _
    $region3: #{attention_block.1} parent=1 // pred_check_branch
      %14 = sbr.rel (0) target = $region5
    $region4: #{attention_block.1} parent=1 // pred_region
      %s16 = ssub.s32 256, 256
      %17 = vsyncadd [#allocation3], %s16
      %s18 = sshll.u32 [#allocation2], 4
      %s19 = int_to_ptr.vmem [resolvable:$true] %s18
      %24 = dma.hbm_to_vmem [thread:$0]  %s0, 256, %s19, [#allocation3], 128, 128, 8
    $region5: #{attention_block.1} parent=1 // pred_fallthru
      _
    // Predicated region
    $region6: #{attention_block.1} parent=1 // pred_check
      _
    $region7: #{attention_block.1} parent=1 // pred_check_branch
      %26 = sbr.rel (0) target = $region9
    $region8: #{attention_block.1} parent=1 // pred_region
      %s28 = ssub.s32 256, 256
      %29 = vsyncadd [#allocation6], %s28
      %s30 = sshll.u32 [#allocation5], 4
      %s31 = int_to_ptr.vmem [resolvable:$true] %s30
      %36 = dma.hbm_to_vmem [thread:$0]  %s1, 256, %s31, [#allocation6], 128, 128, 8
    $region9: #{attention_block.1} parent=1 // pred_fallthru
      _
    // Predicated region
    $region10: #{attention_block.1} parent=1 // pred_check
      _
    $region11: #{attention_block.1} parent=1 // pred_check_branch
      %38 = sbr.rel (0) target = $region13
    $region12: #{attention_block.1} parent=1 // pred_region
      %s40 = ssub.s32 256, 256
      %41 = vsyncadd [#allocation6], %s40
      %s42 = sshll.u32 [#allocation7], 4
      %s43 = int_to_ptr.vmem [resolvable:$true] %s42
      %48 = dma.hbm_to_vmem [thread:$0]  %s2, 256, %s43, [#allocation6], 128, 128, 8
    $region13: #{attention_block.1} parent=1 // pred_fallthru
      _
    // Predicated region
    $region14: #{attention_block.1} parent=1 // pred_check
      _
    $region15: #{attention_block.1} parent=1 // pred_check_branch
      %50 = sbr.rel (0) target = $region17
    $region16: #{attention_block.1} parent=1 // pred_region
      %s52 = ssub.s32 640, 640
      %53 = vsyncadd [#allocation9], %s52
      %s54 = sshll.u32 [#allocation8], 4
      %s55 = int_to_ptr.vmem [resolvable:$true] %s54
      %60 = dma.hbm_to_vmem [thread:$0]  %s3, 640, %s55, [#allocation9], 128, 128, 8
    $region17: #{attention_block.1} parent=1 // pred_fallthru
      _
    // Predicated region
    $region18: #{attention_block.1} parent=1 // pred_check
      _
    $region19: #{attention_block.1} parent=1 // pred_check_branch
      %62 = sbr.rel (0) target = $region21
    $region20: #{attention_block.1} parent=1 // pred_region
      %63 = dma.done [#allocation3], 256
    $region21: #{attention_block.1} parent=1 // pred_fallthru
      _
    // Predicated region
    $region22: #{attention_block.1} parent=1 // pred_check
      _
    $region23: #{attention_block.1} parent=1 // pred_check_branch
      %65 = sbr.rel (0) target = $region25
    $region24: #{attention_block.1} parent=1 // pred_region
      %66 = dma.done [#allocation6], 256
    $region25: #{attention_block.1} parent=1 // pred_fallthru
      _
    // Predicated region
    $region26: #{attention_block.1} parent=1 // pred_check
      _
    $region27: #{attention_block.1} parent=1 // pred_check_branch
      %68 = sbr.rel (0) target = $region29
    $region28: #{attention_block.1} parent=1 // pred_region
      %69 = dma.done [#allocation6], 256
    $region29: #{attention_block.1} parent=1 // pred_fallthru
      _
    // Predicated region
    $region30: #{attention_block.1} parent=1 // pred_check
      _
    $region31: #{attention_block.1} parent=1 // pred_check_branch
      %71 = sbr.rel (0) target = $region33
    $region32: #{attention_block.1} parent=1 // pred_region
      %72 = dma.done [#allocation9], 640
    $region33: #{attention_block.1} parent=1 // pred_fallthru
      _
    %v73 = vld [vmem:[#allocation8 + $0x20] sm:$0x1]
    %v74 = vld [vmem:[#allocation8 + $0x21] sm:$0x1]
    %v75 = vld [vmem:[#allocation2] sm:$0xff]
    %v76 = vld [vmem:[#allocation2 + $0x8] sm:$0xff]
    %vm77 = vcmask 261120
    %v78 = vsel %vm77, %v75, 0.0
    %79 = vadd.xlane.f32.xlu0 %v78
    %v80 = vpop.xlane.xlu0 %79
    %v81 = vsel %vm77, %v76, 0.0
    %82 = vadd.xlane.f32.xlu0 %v81
    %v83 = vpop.xlane.xlu0 %82
    %v84 = vrcp.pop 32.0
    %v85 = vmul.f32 %v80, %v84
    %v86 = vmul.f32 %v83, %v84
    %v87 = vsub.f32 %v75, %v85
    %v88 = vsub.f32 %v76, %v86
    %v89 = vmul.f32 %v87, %v87
    %v90 = vmul.f32 %v88, %v88
    %v91 = vsel %vm77, %v89, 0.0
    %92 = vadd.xlane.f32.xlu0 %v91
    %v93 = vpop.xlane.xlu0 %92
    %v94 = vsel %vm77, %v90, 0.0
    %95 = vadd.xlane.f32.xlu0 %v94
    %v96 = vpop.xlane.xlu0 %95
    %v97 = vmul.f32 %v93, %v84
    %v98 = vmul.f32 %v96, %v84
    %v99 = vadd.f32 %v97, 1e-05
    %v100 = vadd.f32 %v98, 1e-05
    %v101 = vrsqrt.pop %v99
    %v102 = vrsqrt.pop %v100
    %v103 = vmul.f32 %v87, %v101
    %v104 = vmul.f32 %v88, %v102
    %v105 = vlaneseq
    %v106 = vshrl.u32 %v105, 7
    %v107 = vsub.s32 0, %v106
    %v108 = vrot.slane %v73, %v107
    %v109 = vmul.f32 %v103, %v108
    %v110 = vmul.f32 %v104, %v108
    %112 = vrot.lane.b32.xlu0 %v108, 96
    %v113 = vpop.permute.xlu0 %112
    %v115 = vadd.f32 %v109, %v113
    %v116 = vadd.f32 %v110, %v113
    %v117 = vld [vmem:[#allocation5] sm:$0xff]
    %v118 = vld [vmem:[#allocation5 + $0x8] sm:$0xff]
    %v119 = vsel %vm77, %v117, 0.0
    %120 = vadd.xlane.f32.xlu0 %v119
    %v121 = vpop.xlane.xlu0 %120
    %v122 = vsel %vm77, %v118, 0.0
    %123 = vadd.xlane.f32.xlu0 %v122
    %v124 = vpop.xlane.xlu0 %123
    %v125 = vmul.f32 %v121, %v84
    %v126 = vmul.f32 %v124, %v84
    %v127 = vsub.f32 %v117, %v125
    %v128 = vsub.f32 %v118, %v126
    %v129 = vmul.f32 %v127, %v127
    %v130 = vmul.f32 %v128, %v128
    %v131 = vsel %vm77, %v129, 0.0
    %132 = vadd.xlane.f32.xlu0 %v131
    %v133 = vpop.xlane.xlu0 %132
    %v134 = vsel %vm77, %v130, 0.0
    %135 = vadd.xlane.f32.xlu0 %v134
    %v136 = vpop.xlane.xlu0 %135
    %v137 = vmul.f32 %v133, %v84
    %v138 = vmul.f32 %v136, %v84
    %v139 = vadd.f32 %v137, 1e-05
    %v140 = vadd.f32 %v138, 1e-05
    %v141 = vrsqrt.pop %v139
    %v142 = vrsqrt.pop %v140
    %v143 = vmul.f32 %v127, %v141
    %v144 = vmul.f32 %v128, %v142
    %v145 = vmul.f32 %v143, %v108
    %v146 = vmul.f32 %v144, %v108
    %v147 = vadd.f32 %v145, %v113
    %v148 = vadd.f32 %v146, %v113
    %v149 = vld [vmem:[#allocation7] sm:$0xff]
    %v150 = vld [vmem:[#allocation7 + $0x8] sm:$0xff]
    %v151 = vsel %vm77, %v149, 0.0
    %152 = vadd.xlane.f32.xlu0 %v151
    %v153 = vpop.xlane.xlu0 %152
    %v154 = vsel %vm77, %v150, 0.0
    %155 = vadd.xlane.f32.xlu0 %v154
    %v156 = vpop.xlane.xlu0 %155
    %v157 = vmul.f32 %v153, %v84
    %v158 = vmul.f32 %v156, %v84
    %v159 = vsub.f32 %v149, %v157
    %v160 = vsub.f32 %v150, %v158
    %v161 = vmul.f32 %v159, %v159
    %v162 = vmul.f32 %v160, %v160
    %v163 = vsel %vm77, %v161, 0.0
    %164 = vadd.xlane.f32.xlu0 %v163
    %v165 = vpop.xlane.xlu0 %164
    %v166 = vsel %vm77, %v162, 0.0
    %167 = vadd.xlane.f32.xlu0 %v166
    %v168 = vpop.xlane.xlu0 %167
    %v169 = vmul.f32 %v165, %v84
    %v170 = vmul.f32 %v168, %v84
    %v171 = vadd.f32 %v169, 1e-05
    %v172 = vadd.f32 %v170, 1e-05
    %v173 = vrsqrt.pop %v171
    %v174 = vrsqrt.pop %v172
    %v175 = vmul.f32 %v159, %v173
    %v176 = vmul.f32 %v160, %v174
    %v177 = vmul.f32 %v175, %v108
    %v178 = vmul.f32 %v176, %v108
    %v179 = vadd.f32 %v177, %v113
    %v180 = vadd.f32 %v178, %v113
    %v181 = vld [vmem:[#allocation8] sm:$0xff]
    %v182 = vld [vmem:[#allocation8 + $0x8] sm:$0xff]
    %v183 = vld [vmem:[#allocation8 + $0x10] sm:$0xff]
    %v184 = vld [vmem:[#allocation8 + $0x18] sm:$0xff]
    %v185 = vlaneseq
    %v186 = vshrl.u32 %v185, 7
    %v187 = vsub.s32 0, %v186
    %v188 = vrot.slane %v74, %v187
    %v190 = vsel %vm77, %v115, 0
    %v193 = vsel %vm77, %v116, 0
    %195 = vmatprep.subr.mxu0 0.0
    %196 = vmatpush1.msra.mxu0 0.0
    %197 = vmatprep.subr.mxu0 0.0
    %198 = vmatpush1.msra.mxu0 0.0
    %199 = vmatprep.subr.mxu0 0.0
    %200 = vmatpush1.msra.mxu0 0.0
    %201 = vmatprep.subr.mxu0 0.0
    %202 = vmatpush1.msra.mxu0 0.0
    %203 = vmatprep.subr.mxu0 0.0
    %204 = vmatpush1.msra.mxu0 0.0
    %205 = vmatprep.subr.mxu0 0.0
    %206 = vmatpush1.msra.mxu0 0.0
    %207 = vmatprep.subr.mxu0 0.0
    %208 = vmatpush1.msra.mxu0 0.0
    %209 = vmatprep.subr.mxu0 0.0
    %210 = vmatpush1.msra.mxu0 0.0
    %211 = vmatprep.subr.mxu0 0.0
    %212 = vmatpush1.msra.mxu0 0.0
    %213 = vmatprep.subr.mxu0 0.0
    %214 = vmatpush1.msra.mxu0 0.0
    %215 = vmatprep.subr.mxu0 0.0
    %216 = vmatpush1.msra.mxu0 0.0
    %217 = vmatprep.subr.mxu0 0.0
    %218 = vmatpush1.msra.mxu0 0.0
    %219 = vmatprep.subr.mxu0 0.0
    %220 = vmatpush1.msra.mxu0 %v184
    %221 = vmatprep.subr.mxu0 0.0
    %222 = vmatpush1.msra.mxu0 %v183
    %223 = vmatprep.subr.mxu0 0.0
    %224 = vmatpush1.msra.mxu0 %v182
    %225 = vmatprep.subr.mxu0 0.0
    %226 = vmatpush1.msra.mxu0 %v181
    %227 = vmatprep.subr.mxu0 0.0
    %228 = vmatpush2.msra.mxu0 0.0
    %229 = vmatprep.subr.mxu0 0.0
    %230 = vmatpush2.msra.mxu0 0.0
    %231 = vmatprep.subr.mxu0 0.0
    %232 = vmatpush2.msra.mxu0 0.0
    %233 = vmatprep.subr.mxu0 0.0
    %234 = vmatpush2.msra.mxu0 0.0
    %235 = vmatprep.subr.mxu0 0.0
    %236 = vmatpush2.msra.mxu0 0.0
    %237 = vmatprep.subr.mxu0 0.0
    %238 = vmatpush2.msra.mxu0 0.0
    %239 = vmatprep.subr.mxu0 0.0
    %240 = vmatpush2.msra.mxu0 0.0
    %241 = vmatprep.subr.mxu0 0.0
    %242 = vmatpush2.msra.mxu0 0.0
    %243 = vmatprep.subr.mxu0 0.0
    %244 = vmatpush2.msra.mxu0 0.0
    %245 = vmatprep.subr.mxu0 0.0
    %246 = vmatpush2.msra.mxu0 0.0
    %247 = vmatprep.subr.mxu0 0.0
    %248 = vmatpush2.msra.mxu0 0.0
    %249 = vmatprep.subr.mxu0 0.0
    %250 = vmatpush2.msra.mxu0 0.0
    %251 = vmatprep.subr.mxu0 0.0
    %252 = vmatpush2.msra.mxu0 0.0
    %253 = vmatprep.subr.mxu0 0.0
    %254 = vmatpush2.msra.mxu0 0.0
    %255 = vmatprep.subr.mxu0 0.0
    %256 = vmatpush2.msra.mxu0 0.0
    %257 = vmatprep.subr.mxu0 0.0
    %258 = vmatpush2.msra.mxu0 0.0
    %259 = vmatprep.mubr.f32.mxu0 0.0
    %260 = vmatmul.mubr.f32.gmra.mxu0 %v190
    %v261 = vpop.f32.mrf.mxu0
    %v262 = vadd.f32 %v188, %v261
    %v263 = vpop.f32.mrf.mxu0
    %264 = vmatprep.mubr.f32.mxu0 0.0
    %265 = vmatmul.mubr.f32.gmra.mxu0 %v193
    %v266 = vpop.f32.mrf.mxu0
    %v267 = vadd.f32 %v188, %v266
    %v268 = vpop.f32.mrf.mxu0
    %269 = vdwg.mxu0
    %v270 = vmul.f32 %v262, 0.35355338
    %v271 = vmul.f32 %v267, 0.35355338
    %276 = vrot.lane.b32.xlu0 %v181, 96
    %v277 = vpop.permute.xlu0 %276
    %278 = vrot.lane.b32.xlu0 %v182, 96
    %v279 = vpop.permute.xlu0 %278
    %280 = vrot.lane.b32.xlu0 %v183, 96
    %v281 = vpop.permute.xlu0 %280
    %282 = vrot.lane.b32.xlu0 %v184, 96
    %v283 = vpop.permute.xlu0 %282
    %289 = vrot.lane.b32.xlu0 %v188, 96
    %v290 = vpop.permute.xlu0 %289
    %v293 = vsel %vm77, %v147, 0
    %v296 = vsel %vm77, %v148, 0
    %298 = vmatprep.subr.mxu0 0.0
    %299 = vmatpush1.msra.mxu0 0.0
    %300 = vmatprep.subr.mxu0 0.0
    %301 = vmatpush1.msra.mxu0 0.0
    %302 = vmatprep.subr.mxu0 0.0
    %303 = vmatpush1.msra.mxu0 0.0
    %304 = vmatprep.subr.mxu0 0.0
    %305 = vmatpush1.msra.mxu0 0.0
    %306 = vmatprep.subr.mxu0 0.0
    %307 = vmatpush1.msra.mxu0 0.0
    %308 = vmatprep.subr.mxu0 0.0
    %309 = vmatpush1.msra.mxu0 0.0
    %310 = vmatprep.subr.mxu0 0.0
    %311 = vmatpush1.msra.mxu0 0.0
    %312 = vmatprep.subr.mxu0 0.0
    %313 = vmatpush1.msra.mxu0 0.0
    %314 = vmatprep.subr.mxu0 0.0
    %315 = vmatpush1.msra.mxu0 0.0
    %316 = vmatprep.subr.mxu0 0.0
    %317 = vmatpush1.msra.mxu0 0.0
    %318 = vmatprep.subr.mxu0 0.0
    %319 = vmatpush1.msra.mxu0 0.0
    %320 = vmatprep.subr.mxu0 0.0
    %321 = vmatpush1.msra.mxu0 0.0
    %322 = vmatprep.subr.mxu0 0.0
    %323 = vmatpush1.msra.mxu0 %v283
    %324 = vmatprep.subr.mxu0 0.0
    %325 = vmatpush1.msra.mxu0 %v281
    %326 = vmatprep.subr.mxu0 0.0
    %327 = vmatpush1.msra.mxu0 %v279
    %328 = vmatprep.subr.mxu0 0.0
    %329 = vmatpush1.msra.mxu0 %v277
    %330 = vmatprep.subr.mxu0 0.0
    %331 = vmatpush2.msra.mxu0 0.0
    %332 = vmatprep.subr.mxu0 0.0
    %333 = vmatpush2.msra.mxu0 0.0
    %334 = vmatprep.subr.mxu0 0.0
    %335 = vmatpush2.msra.mxu0 0.0
    %336 = vmatprep.subr.mxu0 0.0
    %337 = vmatpush2.msra.mxu0 0.0
    %338 = vmatprep.subr.mxu0 0.0
    %339 = vmatpush2.msra.mxu0 0.0
    %340 = vmatprep.subr.mxu0 0.0
    %341 = vmatpush2.msra.mxu0 0.0
    %342 = vmatprep.subr.mxu0 0.0
    %343 = vmatpush2.msra.mxu0 0.0
    %344 = vmatprep.subr.mxu0 0.0
    %345 = vmatpush2.msra.mxu0 0.0
    %346 = vmatprep.subr.mxu0 0.0
    %347 = vmatpush2.msra.mxu0 0.0
    %348 = vmatprep.subr.mxu0 0.0
    %349 = vmatpush2.msra.mxu0 0.0
    %350 = vmatprep.subr.mxu0 0.0
    %351 = vmatpush2.msra.mxu0 0.0
    %352 = vmatprep.subr.mxu0 0.0
    %353 = vmatpush2.msra.mxu0 0.0
    %354 = vmatprep.subr.mxu0 0.0
    %355 = vmatpush2.msra.mxu0 0.0
    %356 = vmatprep.subr.mxu0 0.0
    %357 = vmatpush2.msra.mxu0 0.0
    %358 = vmatprep.subr.mxu0 0.0
    %359 = vmatpush2.msra.mxu0 0.0
    %360 = vmatprep.subr.mxu0 0.0
    %361 = vmatpush2.msra.mxu0 0.0
    %362 = vmatprep.mubr.f32.mxu0 0.0
    %363 = vmatmul.mubr.f32.gmra.mxu0 %v293
    %v364 = vpop.f32.mrf.mxu0
    %v365 = vadd.f32 %v290, %v364
    %v366 = vpop.f32.mrf.mxu0
    %367 = vmatprep.mubr.f32.mxu0 0.0
    %368 = vmatmul.mubr.f32.gmra.mxu0 %v296
    %v369 = vpop.f32.mrf.mxu0
    %v370 = vadd.f32 %v290, %v369
    %v371 = vpop.f32.mrf.mxu0
    %372 = vdwg.mxu0
    %373 = vrot.lane.b32.xlu0 %v181, 64
    %v374 = vpop.permute.xlu0 %373
    %375 = vrot.lane.b32.xlu0 %v182, 64
    %v376 = vpop.permute.xlu0 %375
    %377 = vrot.lane.b32.xlu0 %v183, 64
    %v378 = vpop.permute.xlu0 %377
    %379 = vrot.lane.b32.xlu0 %v184, 64
    %v380 = vpop.permute.xlu0 %379
    %385 = vrot.lane.b32.xlu0 %v188, 64
    %v386 = vpop.permute.xlu0 %385
    %v389 = vsel %vm77, %v179, 0
    %v392 = vsel %vm77, %v180, 0
    %394 = vmatprep.subr.mxu0 0.0
    %395 = vmatpush1.msra.mxu0 0.0
    %396 = vmatprep.subr.mxu0 0.0
    %397 = vmatpush1.msra.mxu0 0.0
    %398 = vmatprep.subr.mxu0 0.0
    %399 = vmatpush1.msra.mxu0 0.0
    %400 = vmatprep.subr.mxu0 0.0
    %401 = vmatpush1.msra.mxu0 0.0
    %402 = vmatprep.subr.mxu0 0.0
    %403 = vmatpush1.msra.mxu0 0.0
    %404 = vmatprep.subr.mxu0 0.0
    %405 = vmatpush1.msra.mxu0 0.0
    %406 = vmatprep.subr.mxu0 0.0
    %407 = vmatpush1.msra.mxu0 0.0
    %408 = vmatprep.subr.mxu0 0.0
    %409 = vmatpush1.msra.mxu0 0.0
    %410 = vmatprep.subr.mxu0 0.0
    %411 = vmatpush1.msra.mxu0 0.0
    %412 = vmatprep.subr.mxu0 0.0
    %413 = vmatpush1.msra.mxu0 0.0
    %414 = vmatprep.subr.mxu0 0.0
    %415 = vmatpush1.msra.mxu0 0.0
    %416 = vmatprep.subr.mxu0 0.0
    %417 = vmatpush1.msra.mxu0 0.0
    %418 = vmatprep.subr.mxu0 0.0
    %419 = vmatpush1.msra.mxu0 %v380
    %420 = vmatprep.subr.mxu0 0.0
    %421 = vmatpush1.msra.mxu0 %v378
    %422 = vmatprep.subr.mxu0 0.0
    %423 = vmatpush1.msra.mxu0 %v376
    %424 = vmatprep.subr.mxu0 0.0
    %425 = vmatpush1.msra.mxu0 %v374
    %426 = vmatprep.subr.mxu0 0.0
    %427 = vmatpush2.msra.mxu0 0.0
    %428 = vmatprep.subr.mxu0 0.0
    %429 = vmatpush2.msra.mxu0 0.0
    %430 = vmatprep.subr.mxu0 0.0
    %431 = vmatpush2.msra.mxu0 0.0
    %432 = vmatprep.subr.mxu0 0.0
    %433 = vmatpush2.msra.mxu0 0.0
    %434 = vmatprep.subr.mxu0 0.0
    %435 = vmatpush2.msra.mxu0 0.0
    %436 = vmatprep.subr.mxu0 0.0
    %437 = vmatpush2.msra.mxu0 0.0
    %438 = vmatprep.subr.mxu0 0.0
    %439 = vmatpush2.msra.mxu0 0.0
    %440 = vmatprep.subr.mxu0 0.0
    %441 = vmatpush2.msra.mxu0 0.0
    %442 = vmatprep.subr.mxu0 0.0
    %443 = vmatpush2.msra.mxu0 0.0
    %444 = vmatprep.subr.mxu0 0.0
    %445 = vmatpush2.msra.mxu0 0.0
    %446 = vmatprep.subr.mxu0 0.0
    %447 = vmatpush2.msra.mxu0 0.0
    %448 = vmatprep.subr.mxu0 0.0
    %449 = vmatpush2.msra.mxu0 0.0
    %450 = vmatprep.subr.mxu0 0.0
    %451 = vmatpush2.msra.mxu0 0.0
    %452 = vmatprep.subr.mxu0 0.0
    %453 = vmatpush2.msra.mxu0 0.0
    %454 = vmatprep.subr.mxu0 0.0
    %455 = vmatpush2.msra.mxu0 0.0
    %456 = vmatprep.subr.mxu0 0.0
    %457 = vmatpush2.msra.mxu0 0.0
    %458 = vmatprep.mubr.f32.mxu0 0.0
    %459 = vmatmul.mubr.f32.gmra.mxu0 %v389
    %v460 = vpop.f32.mrf.mxu0
    %v461 = vadd.f32 %v386, %v460
    %v462 = vpop.f32.mrf.mxu0
    %463 = vmatprep.mubr.f32.mxu0 0.0
    %464 = vmatmul.mubr.f32.gmra.mxu0 %v392
    %v465 = vpop.f32.mrf.mxu0
    %v466 = vadd.f32 %v386, %v465
    %v467 = vpop.f32.mrf.mxu0
    %468 = vdwg.mxu0
    %471 = vrot.lane.b32.xlu0 %v270, 120
    %v472 = vpop.permute.xlu0 %471
    %473 = vrot.lane.b32.xlu0 %v271, 120
    %v474 = vpop.permute.xlu0 %473
    %475 = vrot.lane.b32.xlu0 %v270, 112
    %v476 = vpop.permute.xlu0 %475
    %477 = vrot.lane.b32.xlu0 %v271, 112
    %v478 = vpop.permute.xlu0 %477
    %479 = vrot.lane.b32.xlu0 %v270, 104
    %v480 = vpop.permute.xlu0 %479
    %481 = vrot.lane.b32.xlu0 %v271, 104
    %v482 = vpop.permute.xlu0 %481
    %485 = vrot.lane.b32.xlu0 %v365, 120
    %v486 = vpop.permute.xlu0 %485
    %487 = vrot.lane.b32.xlu0 %v370, 120
    %v488 = vpop.permute.xlu0 %487
    %489 = vrot.lane.b32.xlu0 %v365, 112
    %v490 = vpop.permute.xlu0 %489
    %491 = vrot.lane.b32.xlu0 %v370, 112
    %v492 = vpop.permute.xlu0 %491
    %493 = vrot.lane.b32.xlu0 %v365, 104
    %v494 = vpop.permute.xlu0 %493
    %495 = vrot.lane.b32.xlu0 %v370, 104
    %v496 = vpop.permute.xlu0 %495
    %499 = vrot.lane.b32.xlu0 %v461, 120
    %v500 = vpop.permute.xlu0 %499
    %501 = vrot.lane.b32.xlu0 %v466, 120
    %v502 = vpop.permute.xlu0 %501
    %505 = vrot.lane.b32.xlu0 %v461, 112
    %v506 = vpop.permute.xlu0 %505
    %507 = vrot.lane.b32.xlu0 %v466, 112
    %v508 = vpop.permute.xlu0 %507
    %511 = vrot.lane.b32.xlu0 %v461, 104
    %v512 = vpop.permute.xlu0 %511
    %513 = vrot.lane.b32.xlu0 %v466, 104
    %v514 = vpop.permute.xlu0 %513
    %vm517 = vcmask 64512
    %v518 = vsel %vm517, %v270, 0
    %v520 = vsel %vm517, %v365, 0
    %522 = vmatprep.subr.mxu0 0.0
    %523 = vmatpush1.xpose.msra.mxu0 0.0
    %524 = vmatprep.subr.mxu0 0.0
    %525 = vmatpush1.xpose.msra.mxu0 0.0
    %526 = vmatprep.subr.mxu0 0.0
    %527 = vmatpush1.xpose.msra.mxu0 0.0
    %528 = vmatprep.subr.mxu0 0.0
    %529 = vmatpush1.xpose.msra.mxu0 0.0
    %530 = vmatprep.subr.mxu0 0.0
    %531 = vmatpush1.xpose.msra.mxu0 0.0
    %532 = vmatprep.subr.mxu0 0.0
    %533 = vmatpush1.xpose.msra.mxu0 0.0
    %534 = vmatprep.subr.mxu0 0.0
    %535 = vmatpush1.xpose.msra.mxu0 0.0
    %536 = vmatprep.subr.mxu0 0.0
    %537 = vmatpush1.xpose.msra.mxu0 0.0
    %538 = vmatprep.subr.mxu0 0.0
    %539 = vmatpush1.xpose.msra.mxu0 0.0
    %540 = vmatprep.subr.mxu0 0.0
    %541 = vmatpush1.xpose.msra.mxu0 0.0
    %542 = vmatprep.subr.mxu0 0.0
    %543 = vmatpush1.xpose.msra.mxu0 0.0
    %544 = vmatprep.subr.mxu0 0.0
    %545 = vmatpush1.xpose.msra.mxu0 0.0
    %546 = vmatprep.subr.mxu0 0.0
    %547 = vmatpush1.xpose.msra.mxu0 0.0
    %548 = vmatprep.subr.mxu0 0.0
    %549 = vmatpush1.xpose.msra.mxu0 0.0
    %550 = vmatprep.subr.mxu0 0.0
    %551 = vmatpush1.xpose.msra.mxu0 0.0
    %552 = vmatprep.subr.mxu0 0.0
    %553 = vmatpush1.xpose.msra.mxu0 %v520
    %554 = vmatprep.subr.mxu0 0.0
    %555 = vmatpush2.xpose.msra.mxu0 0.0
    %556 = vmatprep.subr.mxu0 0.0
    %557 = vmatpush2.xpose.msra.mxu0 0.0
    %558 = vmatprep.subr.mxu0 0.0
    %559 = vmatpush2.xpose.msra.mxu0 0.0
    %560 = vmatprep.subr.mxu0 0.0
    %561 = vmatpush2.xpose.msra.mxu0 0.0
    %562 = vmatprep.subr.mxu0 0.0
    %563 = vmatpush2.xpose.msra.mxu0 0.0
    %564 = vmatprep.subr.mxu0 0.0
    %565 = vmatpush2.xpose.msra.mxu0 0.0
    %566 = vmatprep.subr.mxu0 0.0
    %567 = vmatpush2.xpose.msra.mxu0 0.0
    %568 = vmatprep.subr.mxu0 0.0
    %569 = vmatpush2.xpose.msra.mxu0 0.0
    %570 = vmatprep.subr.mxu0 0.0
    %571 = vmatpush2.xpose.msra.mxu0 0.0
    %572 = vmatprep.subr.mxu0 0.0
    %573 = vmatpush2.xpose.msra.mxu0 0.0
    %574 = vmatprep.subr.mxu0 0.0
    %575 = vmatpush2.xpose.msra.mxu0 0.0
    %576 = vmatprep.subr.mxu0 0.0
    %577 = vmatpush2.xpose.msra.mxu0 0.0
    %578 = vmatprep.subr.mxu0 0.0
    %579 = vmatpush2.xpose.msra.mxu0 0.0
    %580 = vmatprep.subr.mxu0 0.0
    %581 = vmatpush2.xpose.msra.mxu0 0.0
    %582 = vmatprep.subr.mxu0 0.0
    %583 = vmatpush2.xpose.msra.mxu0 0.0
    %584 = vmatprep.subr.mxu0 0.0
    %585 = vmatpush2.xpose.msra.mxu0 0.0
    %586 = vmatprep.mubr.f32.mxu0 0.0
    %587 = vmatmul.mubr.f32.gmra.mxu0 %v518
    %v588 = vpop.f32.mrf.mxu0
    %v589 = vadd.f32 0.0, %v588
    %v590 = vpop.f32.mrf.mxu0
    %591 = vdwg.mxu0
    %v592 = vsel %vm517, %v271, 0
    %v594 = vsel %vm517, %v370, 0
    %596 = vmatprep.subr.mxu0 0.0
    %597 = vmatpush1.xpose.msra.mxu0 0.0
    %598 = vmatprep.subr.mxu0 0.0
    %599 = vmatpush1.xpose.msra.mxu0 0.0
    %600 = vmatprep.subr.mxu0 0.0
    %601 = vmatpush1.xpose.msra.mxu0 0.0
    %602 = vmatprep.subr.mxu0 0.0
    %603 = vmatpush1.xpose.msra.mxu0 0.0
    %604 = vmatprep.subr.mxu0 0.0
    %605 = vmatpush1.xpose.msra.mxu0 0.0
    %606 = vmatprep.subr.mxu0 0.0
    %607 = vmatpush1.xpose.msra.mxu0 0.0
    %608 = vmatprep.subr.mxu0 0.0
    %609 = vmatpush1.xpose.msra.mxu0 0.0
    %610 = vmatprep.subr.mxu0 0.0
    %611 = vmatpush1.xpose.msra.mxu0 0.0
    %612 = vmatprep.subr.mxu0 0.0
    %613 = vmatpush1.xpose.msra.mxu0 0.0
    %614 = vmatprep.subr.mxu0 0.0
    %615 = vmatpush1.xpose.msra.mxu0 0.0
    %616 = vmatprep.subr.mxu0 0.0
    %617 = vmatpush1.xpose.msra.mxu0 0.0
    %618 = vmatprep.subr.mxu0 0.0
    %619 = vmatpush1.xpose.msra.mxu0 0.0
    %620 = vmatprep.subr.mxu0 0.0
    %621 = vmatpush1.xpose.msra.mxu0 0.0
    %622 = vmatprep.subr.mxu0 0.0
    %623 = vmatpush1.xpose.msra.mxu0 0.0
    %624 = vmatprep.subr.mxu0 0.0
    %625 = vmatpush1.xpose.msra.mxu0 0.0
    %626 = vmatprep.subr.mxu0 0.0
    %627 = vmatpush1.xpose.msra.mxu0 %v594
    %628 = vmatprep.subr.mxu0 0.0
    %629 = vmatpush2.xpose.msra.mxu0 0.0
    %630 = vmatprep.subr.mxu0 0.0
    %631 = vmatpush2.xpose.msra.mxu0 0.0
    %632 = vmatprep.subr.mxu0 0.0
    %633 = vmatpush2.xpose.msra.mxu0 0.0
    %634 = vmatprep.subr.mxu0 0.0
    %635 = vmatpush2.xpose.msra.mxu0 0.0
    %636 = vmatprep.subr.mxu0 0.0
    %637 = vmatpush2.xpose.msra.mxu0 0.0
    %638 = vmatprep.subr.mxu0 0.0
    %639 = vmatpush2.xpose.msra.mxu0 0.0
    %640 = vmatprep.subr.mxu0 0.0
    %641 = vmatpush2.xpose.msra.mxu0 0.0
    %642 = vmatprep.subr.mxu0 0.0
    %643 = vmatpush2.xpose.msra.mxu0 0.0
    %644 = vmatprep.subr.mxu0 0.0
    %645 = vmatpush2.xpose.msra.mxu0 0.0
    %646 = vmatprep.subr.mxu0 0.0
    %647 = vmatpush2.xpose.msra.mxu0 0.0
    %648 = vmatprep.subr.mxu0 0.0
    %649 = vmatpush2.xpose.msra.mxu0 0.0
    %650 = vmatprep.subr.mxu0 0.0
    %651 = vmatpush2.xpose.msra.mxu0 0.0
    %652 = vmatprep.subr.mxu0 0.0
    %653 = vmatpush2.xpose.msra.mxu0 0.0
    %654 = vmatprep.subr.mxu0 0.0
    %655 = vmatpush2.xpose.msra.mxu0 0.0
    %656 = vmatprep.subr.mxu0 0.0
    %657 = vmatpush2.xpose.msra.mxu0 0.0
    %658 = vmatprep.subr.mxu0 0.0
    %659 = vmatpush2.xpose.msra.mxu0 0.0
    %660 = vmatprep.mubr.f32.mxu0 0.0
    %661 = vmatmul.mubr.f32.gmra.mxu0 %v592
    %v662 = vpop.f32.mrf.mxu0
    %v663 = vadd.f32 0.0, %v662
    %v664 = vpop.f32.mrf.mxu0
    %665 = vdwg.mxu0
    %v666 = vsel %vm517, %v472, 0
    %v668 = vsel %vm517, %v486, 0
    %670 = vmatprep.subr.mxu0 0.0
    %671 = vmatpush1.xpose.msra.mxu0 0.0
    %672 = vmatprep.subr.mxu0 0.0
    %673 = vmatpush1.xpose.msra.mxu0 0.0
    %674 = vmatprep.subr.mxu0 0.0
    %675 = vmatpush1.xpose.msra.mxu0 0.0
    %676 = vmatprep.subr.mxu0 0.0
    %677 = vmatpush1.xpose.msra.mxu0 0.0
    %678 = vmatprep.subr.mxu0 0.0
    %679 = vmatpush1.xpose.msra.mxu0 0.0
    %680 = vmatprep.subr.mxu0 0.0
    %681 = vmatpush1.xpose.msra.mxu0 0.0
    %682 = vmatprep.subr.mxu0 0.0
    %683 = vmatpush1.xpose.msra.mxu0 0.0
    %684 = vmatprep.subr.mxu0 0.0
    %685 = vmatpush1.xpose.msra.mxu0 0.0
    %686 = vmatprep.subr.mxu0 0.0
    %687 = vmatpush1.xpose.msra.mxu0 0.0
    %688 = vmatprep.subr.mxu0 0.0
    %689 = vmatpush1.xpose.msra.mxu0 0.0
    %690 = vmatprep.subr.mxu0 0.0
    %691 = vmatpush1.xpose.msra.mxu0 0.0
    %692 = vmatprep.subr.mxu0 0.0
    %693 = vmatpush1.xpose.msra.mxu0 0.0
    %694 = vmatprep.subr.mxu0 0.0
    %695 = vmatpush1.xpose.msra.mxu0 0.0
    %696 = vmatprep.subr.mxu0 0.0
    %697 = vmatpush1.xpose.msra.mxu0 0.0
    %698 = vmatprep.subr.mxu0 0.0
    %699 = vmatpush1.xpose.msra.mxu0 0.0
    %700 = vmatprep.subr.mxu0 0.0
    %701 = vmatpush1.xpose.msra.mxu0 %v668
    %702 = vmatprep.subr.mxu0 0.0
    %703 = vmatpush2.xpose.msra.mxu0 0.0
    %704 = vmatprep.subr.mxu0 0.0
    %705 = vmatpush2.xpose.msra.mxu0 0.0
    %706 = vmatprep.subr.mxu0 0.0
    %707 = vmatpush2.xpose.msra.mxu0 0.0
    %708 = vmatprep.subr.mxu0 0.0
    %709 = vmatpush2.xpose.msra.mxu0 0.0
    %710 = vmatprep.subr.mxu0 0.0
    %711 = vmatpush2.xpose.msra.mxu0 0.0
    %712 = vmatprep.subr.mxu0 0.0
    %713 = vmatpush2.xpose.msra.mxu0 0.0
    %714 = vmatprep.subr.mxu0 0.0
    %715 = vmatpush2.xpose.msra.mxu0 0.0
    %716 = vmatprep.subr.mxu0 0.0
    %717 = vmatpush2.xpose.msra.mxu0 0.0
    %718 = vmatprep.subr.mxu0 0.0
    %719 = vmatpush2.xpose.msra.mxu0 0.0
    %720 = vmatprep.subr.mxu0 0.0
    %721 = vmatpush2.xpose.msra.mxu0 0.0
    %722 = vmatprep.subr.mxu0 0.0
    %723 = vmatpush2.xpose.msra.mxu0 0.0
    %724 = vmatprep.subr.mxu0 0.0
    %725 = vmatpush2.xpose.msra.mxu0 0.0
    %726 = vmatprep.subr.mxu0 0.0
    %727 = vmatpush2.xpose.msra.mxu0 0.0
    %728 = vmatprep.subr.mxu0 0.0
    %729 = vmatpush2.xpose.msra.mxu0 0.0
    %730 = vmatprep.subr.mxu0 0.0
    %731 = vmatpush2.xpose.msra.mxu0 0.0
    %732 = vmatprep.subr.mxu0 0.0
    %733 = vmatpush2.xpose.msra.mxu0 0.0
    %734 = vmatprep.mubr.f32.mxu0 0.0
    %735 = vmatmul.mubr.f32.gmra.mxu0 %v666
    %v736 = vpop.f32.mrf.mxu0
    %v737 = vadd.f32 0.0, %v736
    %v738 = vpop.f32.mrf.mxu0
    %739 = vdwg.mxu0
    %v740 = vsel %vm517, %v474, 0
    %v742 = vsel %vm517, %v488, 0
    %744 = vmatprep.subr.mxu0 0.0
    %745 = vmatpush1.xpose.msra.mxu0 0.0
    %746 = vmatprep.subr.mxu0 0.0
    %747 = vmatpush1.xpose.msra.mxu0 0.0
    %748 = vmatprep.subr.mxu0 0.0
    %749 = vmatpush1.xpose.msra.mxu0 0.0
    %750 = vmatprep.subr.mxu0 0.0
    %751 = vmatpush1.xpose.msra.mxu0 0.0
    %752 = vmatprep.subr.mxu0 0.0
    %753 = vmatpush1.xpose.msra.mxu0 0.0
    %754 = vmatprep.subr.mxu0 0.0
    %755 = vmatpush1.xpose.msra.mxu0 0.0
    %756 = vmatprep.subr.mxu0 0.0
    %757 = vmatpush1.xpose.msra.mxu0 0.0
    %758 = vmatprep.subr.mxu0 0.0
    %759 = vmatpush1.xpose.msra.mxu0 0.0
    %760 = vmatprep.subr.mxu0 0.0
    %761 = vmatpush1.xpose.msra.mxu0 0.0
    %762 = vmatprep.subr.mxu0 0.0
    %763 = vmatpush1.xpose.msra.mxu0 0.0
    %764 = vmatprep.subr.mxu0 0.0
    %765 = vmatpush1.xpose.msra.mxu0 0.0
    %766 = vmatprep.subr.mxu0 0.0
    %767 = vmatpush1.xpose.msra.mxu0 0.0
    %768 = vmatprep.subr.mxu0 0.0
    %769 = vmatpush1.xpose.msra.mxu0 0.0
    %770 = vmatprep.subr.mxu0 0.0
    %771 = vmatpush1.xpose.msra.mxu0 0.0
    %772 = vmatprep.subr.mxu0 0.0
    %773 = vmatpush1.xpose.msra.mxu0 0.0
    %774 = vmatprep.subr.mxu0 0.0
    %775 = vmatpush1.xpose.msra.mxu0 %v742
    %776 = vmatprep.subr.mxu0 0.0
    %777 = vmatpush2.xpose.msra.mxu0 0.0
    %778 = vmatprep.subr.mxu0 0.0
    %779 = vmatpush2.xpose.msra.mxu0 0.0
    %780 = vmatprep.subr.mxu0 0.0
    %781 = vmatpush2.xpose.msra.mxu0 0.0
    %782 = vmatprep.subr.mxu0 0.0
    %783 = vmatpush2.xpose.msra.mxu0 0.0
    %784 = vmatprep.subr.mxu0 0.0
    %785 = vmatpush2.xpose.msra.mxu0 0.0
    %786 = vmatprep.subr.mxu0 0.0
    %787 = vmatpush2.xpose.msra.mxu0 0.0
    %788 = vmatprep.subr.mxu0 0.0
    %789 = vmatpush2.xpose.msra.mxu0 0.0
    %790 = vmatprep.subr.mxu0 0.0
    %791 = vmatpush2.xpose.msra.mxu0 0.0
    %792 = vmatprep.subr.mxu0 0.0
    %793 = vmatpush2.xpose.msra.mxu0 0.0
    %794 = vmatprep.subr.mxu0 0.0
    %795 = vmatpush2.xpose.msra.mxu0 0.0
    %796 = vmatprep.subr.mxu0 0.0
    %797 = vmatpush2.xpose.msra.mxu0 0.0
    %798 = vmatprep.subr.mxu0 0.0
    %799 = vmatpush2.xpose.msra.mxu0 0.0
    %800 = vmatprep.subr.mxu0 0.0
    %801 = vmatpush2.xpose.msra.mxu0 0.0
    %802 = vmatprep.subr.mxu0 0.0
    %803 = vmatpush2.xpose.msra.mxu0 0.0
    %804 = vmatprep.subr.mxu0 0.0
    %805 = vmatpush2.xpose.msra.mxu0 0.0
    %806 = vmatprep.subr.mxu0 0.0
    %807 = vmatpush2.xpose.msra.mxu0 0.0
    %808 = vmatprep.mubr.f32.mxu0 0.0
    %809 = vmatmul.mubr.f32.gmra.mxu0 %v740
    %v810 = vpop.f32.mrf.mxu0
    %v811 = vadd.f32 0.0, %v810
    %v812 = vpop.f32.mrf.mxu0
    %813 = vdwg.mxu0
    %v814 = vsel %vm517, %v476, 0
    %v816 = vsel %vm517, %v490, 0
    %818 = vmatprep.subr.mxu0 0.0
    %819 = vmatpush1.xpose.msra.mxu0 0.0
    %820 = vmatprep.subr.mxu0 0.0
    %821 = vmatpush1.xpose.msra.mxu0 0.0
    %822 = vmatprep.subr.mxu0 0.0
    %823 = vmatpush1.xpose.msra.mxu0 0.0
    %824 = vmatprep.subr.mxu0 0.0
    %825 = vmatpush1.xpose.msra.mxu0 0.0
    %826 = vmatprep.subr.mxu0 0.0
    %827 = vmatpush1.xpose.msra.mxu0 0.0
    %828 = vmatprep.subr.mxu0 0.0
    %829 = vmatpush1.xpose.msra.mxu0 0.0
    %830 = vmatprep.subr.mxu0 0.0
    %831 = vmatpush1.xpose.msra.mxu0 0.0
    %832 = vmatprep.subr.mxu0 0.0
    %833 = vmatpush1.xpose.msra.mxu0 0.0
    %834 = vmatprep.subr.mxu0 0.0
    %835 = vmatpush1.xpose.msra.mxu0 0.0
    %836 = vmatprep.subr.mxu0 0.0
    %837 = vmatpush1.xpose.msra.mxu0 0.0
    %838 = vmatprep.subr.mxu0 0.0
    %839 = vmatpush1.xpose.msra.mxu0 0.0
    %840 = vmatprep.subr.mxu0 0.0
    %841 = vmatpush1.xpose.msra.mxu0 0.0
    %842 = vmatprep.subr.mxu0 0.0
    %843 = vmatpush1.xpose.msra.mxu0 0.0
    %844 = vmatprep.subr.mxu0 0.0
    %845 = vmatpush1.xpose.msra.mxu0 0.0
    %846 = vmatprep.subr.mxu0 0.0
    %847 = vmatpush1.xpose.msra.mxu0 0.0
    %848 = vmatprep.subr.mxu0 0.0
    %849 = vmatpush1.xpose.msra.mxu0 %v816
    %850 = vmatprep.subr.mxu0 0.0
    %851 = vmatpush2.xpose.msra.mxu0 0.0
    %852 = vmatprep.subr.mxu0 0.0
    %853 = vmatpush2.xpose.msra.mxu0 0.0
    %854 = vmatprep.subr.mxu0 0.0
    %855 = vmatpush2.xpose.msra.mxu0 0.0
    %856 = vmatprep.subr.mxu0 0.0
    %857 = vmatpush2.xpose.msra.mxu0 0.0
    %858 = vmatprep.subr.mxu0 0.0
    %859 = vmatpush2.xpose.msra.mxu0 0.0
    %860 = vmatprep.subr.mxu0 0.0
    %861 = vmatpush2.xpose.msra.mxu0 0.0
    %862 = vmatprep.subr.mxu0 0.0
    %863 = vmatpush2.xpose.msra.mxu0 0.0
    %864 = vmatprep.subr.mxu0 0.0
    %865 = vmatpush2.xpose.msra.mxu0 0.0
    %866 = vmatprep.subr.mxu0 0.0
    %867 = vmatpush2.xpose.msra.mxu0 0.0
    %868 = vmatprep.subr.mxu0 0.0
    %869 = vmatpush2.xpose.msra.mxu0 0.0
    %870 = vmatprep.subr.mxu0 0.0
    %871 = vmatpush2.xpose.msra.mxu0 0.0
    %872 = vmatprep.subr.mxu0 0.0
    %873 = vmatpush2.xpose.msra.mxu0 0.0
    %874 = vmatprep.subr.mxu0 0.0
    %875 = vmatpush2.xpose.msra.mxu0 0.0
    %876 = vmatprep.subr.mxu0 0.0
    %877 = vmatpush2.xpose.msra.mxu0 0.0
    %878 = vmatprep.subr.mxu0 0.0
    %879 = vmatpush2.xpose.msra.mxu0 0.0
    %880 = vmatprep.subr.mxu0 0.0
    %881 = vmatpush2.xpose.msra.mxu0 0.0
    %882 = vmatprep.mubr.f32.mxu0 0.0
    %883 = vmatmul.mubr.f32.gmra.mxu0 %v814
    %v884 = vpop.f32.mrf.mxu0
    %v885 = vadd.f32 0.0, %v884
    %v886 = vpop.f32.mrf.mxu0
    %887 = vdwg.mxu0
    %v888 = vsel %vm517, %v478, 0
    %v890 = vsel %vm517, %v492, 0
    %892 = vmatprep.subr.mxu0 0.0
    %893 = vmatpush1.xpose.msra.mxu0 0.0
    %894 = vmatprep.subr.mxu0 0.0
    %895 = vmatpush1.xpose.msra.mxu0 0.0
    %896 = vmatprep.subr.mxu0 0.0
    %897 = vmatpush1.xpose.msra.mxu0 0.0
    %898 = vmatprep.subr.mxu0 0.0
    %899 = vmatpush1.xpose.msra.mxu0 0.0
    %900 = vmatprep.subr.mxu0 0.0
    %901 = vmatpush1.xpose.msra.mxu0 0.0
    %902 = vmatprep.subr.mxu0 0.0
    %903 = vmatpush1.xpose.msra.mxu0 0.0
    %904 = vmatprep.subr.mxu0 0.0
    %905 = vmatpush1.xpose.msra.mxu0 0.0
    %906 = vmatprep.subr.mxu0 0.0
    %907 = vmatpush1.xpose.msra.mxu0 0.0
    %908 = vmatprep.subr.mxu0 0.0
    %909 = vmatpush1.xpose.msra.mxu0 0.0
    %910 = vmatprep.subr.mxu0 0.0
    %911 = vmatpush1.xpose.msra.mxu0 0.0
    %912 = vmatprep.subr.mxu0 0.0
    %913 = vmatpush1.xpose.msra.mxu0 0.0
    %914 = vmatprep.subr.mxu0 0.0
    %915 = vmatpush1.xpose.msra.mxu0 0.0
    %916 = vmatprep.subr.mxu0 0.0
    %917 = vmatpush1.xpose.msra.mxu0 0.0
    %918 = vmatprep.subr.mxu0 0.0
    %919 = vmatpush1.xpose.msra.mxu0 0.0
    %920 = vmatprep.subr.mxu0 0.0
    %921 = vmatpush1.xpose.msra.mxu0 0.0
    %922 = vmatprep.subr.mxu0 0.0
    %923 = vmatpush1.xpose.msra.mxu0 %v890
    %924 = vmatprep.subr.mxu0 0.0
    %925 = vmatpush2.xpose.msra.mxu0 0.0
    %926 = vmatprep.subr.mxu0 0.0
    %927 = vmatpush2.xpose.msra.mxu0 0.0
    %928 = vmatprep.subr.mxu0 0.0
    %929 = vmatpush2.xpose.msra.mxu0 0.0
    %930 = vmatprep.subr.mxu0 0.0
    %931 = vmatpush2.xpose.msra.mxu0 0.0
    %932 = vmatprep.subr.mxu0 0.0
    %933 = vmatpush2.xpose.msra.mxu0 0.0
    %934 = vmatprep.subr.mxu0 0.0
    %935 = vmatpush2.xpose.msra.mxu0 0.0
    %936 = vmatprep.subr.mxu0 0.0
    %937 = vmatpush2.xpose.msra.mxu0 0.0
    %938 = vmatprep.subr.mxu0 0.0
    %939 = vmatpush2.xpose.msra.mxu0 0.0
    %940 = vmatprep.subr.mxu0 0.0
    %941 = vmatpush2.xpose.msra.mxu0 0.0
    %942 = vmatprep.subr.mxu0 0.0
    %943 = vmatpush2.xpose.msra.mxu0 0.0
    %944 = vmatprep.subr.mxu0 0.0
    %945 = vmatpush2.xpose.msra.mxu0 0.0
    %946 = vmatprep.subr.mxu0 0.0
    %947 = vmatpush2.xpose.msra.mxu0 0.0
    %948 = vmatprep.subr.mxu0 0.0
    %949 = vmatpush2.xpose.msra.mxu0 0.0
    %950 = vmatprep.subr.mxu0 0.0
    %951 = vmatpush2.xpose.msra.mxu0 0.0
    %952 = vmatprep.subr.mxu0 0.0
    %953 = vmatpush2.xpose.msra.mxu0 0.0
    %954 = vmatprep.subr.mxu0 0.0
    %955 = vmatpush2.xpose.msra.mxu0 0.0
    %956 = vmatprep.mubr.f32.mxu0 0.0
    %957 = vmatmul.mubr.f32.gmra.mxu0 %v888
    %v958 = vpop.f32.mrf.mxu0
    %v959 = vadd.f32 0.0, %v958
    %v960 = vpop.f32.mrf.mxu0
    %961 = vdwg.mxu0
    %v962 = vsel %vm517, %v480, 0
    %v964 = vsel %vm517, %v494, 0
    %966 = vmatprep.subr.mxu0 0.0
    %967 = vmatpush1.xpose.msra.mxu0 0.0
    %968 = vmatprep.subr.mxu0 0.0
    %969 = vmatpush1.xpose.msra.mxu0 0.0
    %970 = vmatprep.subr.mxu0 0.0
    %971 = vmatpush1.xpose.msra.mxu0 0.0
    %972 = vmatprep.subr.mxu0 0.0
    %973 = vmatpush1.xpose.msra.mxu0 0.0
    %974 = vmatprep.subr.mxu0 0.0
    %975 = vmatpush1.xpose.msra.mxu0 0.0
    %976 = vmatprep.subr.mxu0 0.0
    %977 = vmatpush1.xpose.msra.mxu0 0.0
    %978 = vmatprep.subr.mxu0 0.0
    %979 = vmatpush1.xpose.msra.mxu0 0.0
    %980 = vmatprep.subr.mxu0 0.0
    %981 = vmatpush1.xpose.msra.mxu0 0.0
    %982 = vmatprep.subr.mxu0 0.0
    %983 = vmatpush1.xpose.msra.mxu0 0.0
    %984 = vmatprep.subr.mxu0 0.0
    %985 = vmatpush1.xpose.msra.mxu0 0.0
    %986 = vmatprep.subr.mxu0 0.0
    %987 = vmatpush1.xpose.msra.mxu0 0.0
    %988 = vmatprep.subr.mxu0 0.0
    %989 = vmatpush1.xpose.msra.mxu0 0.0
    %990 = vmatprep.subr.mxu0 0.0
    %991 = vmatpush1.xpose.msra.mxu0 0.0
    %992 = vmatprep.subr.mxu0 0.0
    %993 = vmatpush1.xpose.msra.mxu0 0.0
    %994 = vmatprep.subr.mxu0 0.0
    %995 = vmatpush1.xpose.msra.mxu0 0.0
    %996 = vmatprep.subr.mxu0 0.0
    %997 = vmatpush1.xpose.msra.mxu0 %v964
    %998 = vmatprep.subr.mxu0 0.0
    %999 = vmatpush2.xpose.msra.mxu0 0.0
    %1000 = vmatprep.subr.mxu0 0.0
    %1001 = vmatpush2.xpose.msra.mxu0 0.0
    %1002 = vmatprep.subr.mxu0 0.0
    %1003 = vmatpush2.xpose.msra.mxu0 0.0
    %1004 = vmatprep.subr.mxu0 0.0
    %1005 = vmatpush2.xpose.msra.mxu0 0.0
    %1006 = vmatprep.subr.mxu0 0.0
    %1007 = vmatpush2.xpose.msra.mxu0 0.0
    %1008 = vmatprep.subr.mxu0 0.0
    %1009 = vmatpush2.xpose.msra.mxu0 0.0
    %1010 = vmatprep.subr.mxu0 0.0
    %1011 = vmatpush2.xpose.msra.mxu0 0.0
    %1012 = vmatprep.subr.mxu0 0.0
    %1013 = vmatpush2.xpose.msra.mxu0 0.0
    %1014 = vmatprep.subr.mxu0 0.0
    %1015 = vmatpush2.xpose.msra.mxu0 0.0
    %1016 = vmatprep.subr.mxu0 0.0
    %1017 = vmatpush2.xpose.msra.mxu0 0.0
    %1018 = vmatprep.subr.mxu0 0.0
    %1019 = vmatpush2.xpose.msra.mxu0 0.0
    %1020 = vmatprep.subr.mxu0 0.0
    %1021 = vmatpush2.xpose.msra.mxu0 0.0
    %1022 = vmatprep.subr.mxu0 0.0
    %1023 = vmatpush2.xpose.msra.mxu0 0.0
    %1024 = vmatprep.subr.mxu0 0.0
    %1025 = vmatpush2.xpose.msra.mxu0 0.0
    %1026 = vmatprep.subr.mxu0 0.0
    %1027 = vmatpush2.xpose.msra.mxu0 0.0
    %1028 = vmatprep.subr.mxu0 0.0
    %1029 = vmatpush2.xpose.msra.mxu0 0.0
    %1030 = vmatprep.mubr.f32.mxu0 0.0
    %1031 = vmatmul.mubr.f32.gmra.mxu0 %v962
    %v1032 = vpop.f32.mrf.mxu0
    %v1033 = vadd.f32 0.0, %v1032
    %v1034 = vpop.f32.mrf.mxu0
    %1035 = vdwg.mxu0
    %v1036 = vsel %vm517, %v482, 0
    %v1038 = vsel %vm517, %v496, 0
    %1040 = vmatprep.subr.mxu0 0.0
    %1041 = vmatpush1.xpose.msra.mxu0 0.0
    %1042 = vmatprep.subr.mxu0 0.0
    %1043 = vmatpush1.xpose.msra.mxu0 0.0
    %1044 = vmatprep.subr.mxu0 0.0
    %1045 = vmatpush1.xpose.msra.mxu0 0.0
    %1046 = vmatprep.subr.mxu0 0.0
    %1047 = vmatpush1.xpose.msra.mxu0 0.0
    %1048 = vmatprep.subr.mxu0 0.0
    %1049 = vmatpush1.xpose.msra.mxu0 0.0
    %1050 = vmatprep.subr.mxu0 0.0
    %1051 = vmatpush1.xpose.msra.mxu0 0.0
    %1052 = vmatprep.subr.mxu0 0.0
    %1053 = vmatpush1.xpose.msra.mxu0 0.0
    %1054 = vmatprep.subr.mxu0 0.0
    %1055 = vmatpush1.xpose.msra.mxu0 0.0
    %1056 = vmatprep.subr.mxu0 0.0
    %1057 = vmatpush1.xpose.msra.mxu0 0.0
    %1058 = vmatprep.subr.mxu0 0.0
    %1059 = vmatpush1.xpose.msra.mxu0 0.0
    %1060 = vmatprep.subr.mxu0 0.0
    %1061 = vmatpush1.xpose.msra.mxu0 0.0
    %1062 = vmatprep.subr.mxu0 0.0
    %1063 = vmatpush1.xpose.msra.mxu0 0.0
    %1064 = vmatprep.subr.mxu0 0.0
    %1065 = vmatpush1.xpose.msra.mxu0 0.0
    %1066 = vmatprep.subr.mxu0 0.0
    %1067 = vmatpush1.xpose.msra.mxu0 0.0
    %1068 = vmatprep.subr.mxu0 0.0
    %1069 = vmatpush1.xpose.msra.mxu0 0.0
    %1070 = vmatprep.subr.mxu0 0.0
    %1071 = vmatpush1.xpose.msra.mxu0 %v1038
    %1072 = vmatprep.subr.mxu0 0.0
    %1073 = vmatpush2.xpose.msra.mxu0 0.0
    %1074 = vmatprep.subr.mxu0 0.0
    %1075 = vmatpush2.xpose.msra.mxu0 0.0
    %1076 = vmatprep.subr.mxu0 0.0
    %1077 = vmatpush2.xpose.msra.mxu0 0.0
    %1078 = vmatprep.subr.mxu0 0.0
    %1079 = vmatpush2.xpose.msra.mxu0 0.0
    %1080 = vmatprep.subr.mxu0 0.0
    %1081 = vmatpush2.xpose.msra.mxu0 0.0
    %1082 = vmatprep.subr.mxu0 0.0
    %1083 = vmatpush2.xpose.msra.mxu0 0.0
    %1084 = vmatprep.subr.mxu0 0.0
    %1085 = vmatpush2.xpose.msra.mxu0 0.0
    %1086 = vmatprep.subr.mxu0 0.0
    %1087 = vmatpush2.xpose.msra.mxu0 0.0
    %1088 = vmatprep.subr.mxu0 0.0
    %1089 = vmatpush2.xpose.msra.mxu0 0.0
    %1090 = vmatprep.subr.mxu0 0.0
    %1091 = vmatpush2.xpose.msra.mxu0 0.0
    %1092 = vmatprep.subr.mxu0 0.0
    %1093 = vmatpush2.xpose.msra.mxu0 0.0
    %1094 = vmatprep.subr.mxu0 0.0
    %1095 = vmatpush2.xpose.msra.mxu0 0.0
    %1096 = vmatprep.subr.mxu0 0.0
    %1097 = vmatpush2.xpose.msra.mxu0 0.0
    %1098 = vmatprep.subr.mxu0 0.0
    %1099 = vmatpush2.xpose.msra.mxu0 0.0
    %1100 = vmatprep.subr.mxu0 0.0
    %1101 = vmatpush2.xpose.msra.mxu0 0.0
    %1102 = vmatprep.subr.mxu0 0.0
    %1103 = vmatpush2.xpose.msra.mxu0 0.0
    %1104 = vmatprep.mubr.f32.mxu0 0.0
    %1105 = vmatmul.mubr.f32.gmra.mxu0 %v1036
    %v1106 = vpop.f32.mrf.mxu0
    %v1107 = vadd.f32 0.0, %v1106
    %v1108 = vpop.f32.mrf.mxu0
    %1109 = vdwg.mxu0
    %v1110 = vsel %vm517, %v589, -inf
    %1111 = vmax.xlane.f32.xlu0 %v1110
    %v1112 = vpop.xlane.xlu0 %1111
    %v1113 = vsel %vm517, %v663, -inf
    %1114 = vmax.xlane.f32.xlu0 %v1113
    %v1115 = vpop.xlane.xlu0 %1114
    %v1116 = vsel %vm517, %v737, -inf
    %1117 = vmax.xlane.f32.xlu0 %v1116
    %v1118 = vpop.xlane.xlu0 %1117
    %v1119 = vsel %vm517, %v811, -inf
    %1120 = vmax.xlane.f32.xlu0 %v1119
    %v1121 = vpop.xlane.xlu0 %1120
    %v1122 = vsel %vm517, %v885, -inf
    %1123 = vmax.xlane.f32.xlu0 %v1122
    %v1124 = vpop.xlane.xlu0 %1123
    %v1125 = vsel %vm517, %v959, -inf
    %1126 = vmax.xlane.f32.xlu0 %v1125
    %v1127 = vpop.xlane.xlu0 %1126
    %v1128 = vsel %vm517, %v1033, -inf
    %1129 = vmax.xlane.f32.xlu0 %v1128
    %v1130 = vpop.xlane.xlu0 %1129
    %v1131 = vsel %vm517, %v1107, -inf
    %1132 = vmax.xlane.f32.xlu0 %v1131
    %v1133 = vpop.xlane.xlu0 %1132
    %v1134 = vsub.f32 %v589, %v1112
    %v1135 = vsub.f32 %v663, %v1115
    %v1136 = vsub.f32 %v737, %v1118
    %v1137 = vsub.f32 %v811, %v1121
    %v1138 = vsub.f32 %v885, %v1124
    %v1139 = vsub.f32 %v959, %v1127
    %v1140 = vsub.f32 %v1033, %v1130
    %v1141 = vsub.f32 %v1107, %v1133
    %v1142 = vmul.f32 %v1134, 1.442695
    %v1143 = vpow.pop %v1142
    %v1144 = vmul.f32 %v1135, 1.442695
    %v1145 = vpow.pop %v1144
    %v1146 = vmul.f32 %v1136, 1.442695
    %v1147 = vpow.pop %v1146
    %v1148 = vmul.f32 %v1137, 1.442695
    %v1149 = vpow.pop %v1148
    %v1150 = vmul.f32 %v1138, 1.442695
    %v1151 = vpow.pop %v1150
    %v1152 = vmul.f32 %v1139, 1.442695
    %v1153 = vpow.pop %v1152
    %v1154 = vmul.f32 %v1140, 1.442695
    %v1155 = vpow.pop %v1154
    %v1156 = vmul.f32 %v1141, 1.442695
    %v1157 = vpow.pop %v1156
    %v1158 = vsel %vm517, %v1143, 0.0
    %1159 = vadd.xlane.f32.xlu0 %v1158
    %v1160 = vpop.xlane.xlu0 %1159
    %v1161 = vsel %vm517, %v1145, 0.0
    %1162 = vadd.xlane.f32.xlu0 %v1161
    %v1163 = vpop.xlane.xlu0 %1162
    %v1164 = vsel %vm517, %v1147, 0.0
    %1165 = vadd.xlane.f32.xlu0 %v1164
    %v1166 = vpop.xlane.xlu0 %1165
    %v1167 = vsel %vm517, %v1149, 0.0
    %1168 = vadd.xlane.f32.xlu0 %v1167
    %v1169 = vpop.xlane.xlu0 %1168
    %v1170 = vsel %vm517, %v1151, 0.0
    %1171 = vadd.xlane.f32.xlu0 %v1170
    %v1172 = vpop.xlane.xlu0 %1171
    %v1173 = vsel %vm517, %v1153, 0.0
    %1174 = vadd.xlane.f32.xlu0 %v1173
    %v1175 = vpop.xlane.xlu0 %1174
    %v1176 = vsel %vm517, %v1155, 0.0
    %1177 = vadd.xlane.f32.xlu0 %v1176
    %v1178 = vpop.xlane.xlu0 %1177
    %v1179 = vsel %vm517, %v1157, 0.0
    %1180 = vadd.xlane.f32.xlu0 %v1179
    %v1181 = vpop.xlane.xlu0 %1180
    %v1182 = vrcp.pop %v1160
    %v1183 = vrcp.pop %v1163
    %v1184 = vrcp.pop %v1166
    %v1185 = vrcp.pop %v1169
    %v1186 = vrcp.pop %v1172
    %v1187 = vrcp.pop %v1175
    %v1188 = vrcp.pop %v1178
    %v1189 = vrcp.pop %v1181
    %v1190 = vmul.f32 %v1143, %v1182
    %v1191 = vmul.f32 %v1145, %v1183
    %v1192 = vmul.f32 %v1147, %v1184
    %v1193 = vmul.f32 %v1149, %v1185
    %v1194 = vmul.f32 %v1151, %v1186
    %v1195 = vmul.f32 %v1153, %v1187
    %v1196 = vmul.f32 %v1155, %v1188
    %v1197 = vmul.f32 %v1157, %v1189
    %v1199 = vsel %vm517, %v1190, 0
    %1201 = vmatprep.subr.mxu0 0.0
    %1202 = vmatpush1.msra.mxu0 0.0
    %1203 = vmatprep.subr.mxu0 0.0
    %1204 = vmatpush1.msra.mxu0 0.0
    %1205 = vmatprep.subr.mxu0 0.0
    %1206 = vmatpush1.msra.mxu0 0.0
    %1207 = vmatprep.subr.mxu0 0.0
    %1208 = vmatpush1.msra.mxu0 0.0
    %1209 = vmatprep.subr.mxu0 0.0
    %1210 = vmatpush1.msra.mxu0 0.0
    %1211 = vmatprep.subr.mxu0 0.0
    %1212 = vmatpush1.msra.mxu0 0.0
    %1213 = vmatprep.subr.mxu0 0.0
    %1214 = vmatpush1.msra.mxu0 0.0
    %1215 = vmatprep.subr.mxu0 0.0
    %1216 = vmatpush1.msra.mxu0 0.0
    %1217 = vmatprep.subr.mxu0 0.0
    %1218 = vmatpush1.msra.mxu0 0.0
    %1219 = vmatprep.subr.mxu0 0.0
    %1220 = vmatpush1.msra.mxu0 0.0
    %1221 = vmatprep.subr.mxu0 0.0
    %1222 = vmatpush1.msra.mxu0 0.0
    %1223 = vmatprep.subr.mxu0 0.0
    %1224 = vmatpush1.msra.mxu0 0.0
    %1225 = vmatprep.subr.mxu0 0.0
    %1226 = vmatpush1.msra.mxu0 0.0
    %1227 = vmatprep.subr.mxu0 0.0
    %1228 = vmatpush1.msra.mxu0 0.0
    %1229 = vmatprep.subr.mxu0 0.0
    %1230 = vmatpush1.msra.mxu0 0.0
    %1231 = vmatprep.subr.mxu0 0.0
    %1232 = vmatpush1.msra.mxu0 %v461
    %1233 = vmatprep.subr.mxu0 0.0
    %1234 = vmatpush2.msra.mxu0 0.0
    %1235 = vmatprep.subr.mxu0 0.0
    %1236 = vmatpush2.msra.mxu0 0.0
    %1237 = vmatprep.subr.mxu0 0.0
    %1238 = vmatpush2.msra.mxu0 0.0
    %1239 = vmatprep.subr.mxu0 0.0
    %1240 = vmatpush2.msra.mxu0 0.0
    %1241 = vmatprep.subr.mxu0 0.0
    %1242 = vmatpush2.msra.mxu0 0.0
    %1243 = vmatprep.subr.mxu0 0.0
    %1244 = vmatpush2.msra.mxu0 0.0
    %1245 = vmatprep.subr.mxu0 0.0
    %1246 = vmatpush2.msra.mxu0 0.0
    %1247 = vmatprep.subr.mxu0 0.0
    %1248 = vmatpush2.msra.mxu0 0.0
    %1249 = vmatprep.subr.mxu0 0.0
    %1250 = vmatpush2.msra.mxu0 0.0
    %1251 = vmatprep.subr.mxu0 0.0
    %1252 = vmatpush2.msra.mxu0 0.0
    %1253 = vmatprep.subr.mxu0 0.0
    %1254 = vmatpush2.msra.mxu0 0.0
    %1255 = vmatprep.subr.mxu0 0.0
    %1256 = vmatpush2.msra.mxu0 0.0
    %1257 = vmatprep.subr.mxu0 0.0
    %1258 = vmatpush2.msra.mxu0 0.0
    %1259 = vmatprep.subr.mxu0 0.0
    %1260 = vmatpush2.msra.mxu0 0.0
    %1261 = vmatprep.subr.mxu0 0.0
    %1262 = vmatpush2.msra.mxu0 0.0
    %1263 = vmatprep.subr.mxu0 0.0
    %1264 = vmatpush2.msra.mxu0 0.0
    %1265 = vmatprep.mubr.f32.mxu0 0.0
    %1266 = vmatmul.mubr.f32.gmra.mxu0 %v1199
    %v1267 = vpop.f32.mrf.mxu0
    %v1268 = vadd.f32 0.0, %v1267
    %v1269 = vpop.f32.mrf.mxu0
    %1270 = vdwg.mxu0
    %v1272 = vsel %vm517, %v1191, 0
    %1274 = vmatprep.subr.mxu0 0.0
    %1275 = vmatpush1.msra.mxu0 0.0
    %1276 = vmatprep.subr.mxu0 0.0
    %1277 = vmatpush1.msra.mxu0 0.0
    %1278 = vmatprep.subr.mxu0 0.0
    %1279 = vmatpush1.msra.mxu0 0.0
    %1280 = vmatprep.subr.mxu0 0.0
    %1281 = vmatpush1.msra.mxu0 0.0
    %1282 = vmatprep.subr.mxu0 0.0
    %1283 = vmatpush1.msra.mxu0 0.0
    %1284 = vmatprep.subr.mxu0 0.0
    %1285 = vmatpush1.msra.mxu0 0.0
    %1286 = vmatprep.subr.mxu0 0.0
    %1287 = vmatpush1.msra.mxu0 0.0
    %1288 = vmatprep.subr.mxu0 0.0
    %1289 = vmatpush1.msra.mxu0 0.0
    %1290 = vmatprep.subr.mxu0 0.0
    %1291 = vmatpush1.msra.mxu0 0.0
    %1292 = vmatprep.subr.mxu0 0.0
    %1293 = vmatpush1.msra.mxu0 0.0
    %1294 = vmatprep.subr.mxu0 0.0
    %1295 = vmatpush1.msra.mxu0 0.0
    %1296 = vmatprep.subr.mxu0 0.0
    %1297 = vmatpush1.msra.mxu0 0.0
    %1298 = vmatprep.subr.mxu0 0.0
    %1299 = vmatpush1.msra.mxu0 0.0
    %1300 = vmatprep.subr.mxu0 0.0
    %1301 = vmatpush1.msra.mxu0 0.0
    %1302 = vmatprep.subr.mxu0 0.0
    %1303 = vmatpush1.msra.mxu0 0.0
    %1304 = vmatprep.subr.mxu0 0.0
    %1305 = vmatpush1.msra.mxu0 %v466
    %1306 = vmatprep.subr.mxu0 0.0
    %1307 = vmatpush2.msra.mxu0 0.0
    %1308 = vmatprep.subr.mxu0 0.0
    %1309 = vmatpush2.msra.mxu0 0.0
    %1310 = vmatprep.subr.mxu0 0.0
    %1311 = vmatpush2.msra.mxu0 0.0
    %1312 = vmatprep.subr.mxu0 0.0
    %1313 = vmatpush2.msra.mxu0 0.0
    %1314 = vmatprep.subr.mxu0 0.0
    %1315 = vmatpush2.msra.mxu0 0.0
    %1316 = vmatprep.subr.mxu0 0.0
    %1317 = vmatpush2.msra.mxu0 0.0
    %1318 = vmatprep.subr.mxu0 0.0
    %1319 = vmatpush2.msra.mxu0 0.0
    %1320 = vmatprep.subr.mxu0 0.0
    %1321 = vmatpush2.msra.mxu0 0.0
    %1322 = vmatprep.subr.mxu0 0.0
    %1323 = vmatpush2.msra.mxu0 0.0
    %1324 = vmatprep.subr.mxu0 0.0
    %1325 = vmatpush2.msra.mxu0 0.0
    %1326 = vmatprep.subr.mxu0 0.0
    %1327 = vmatpush2.msra.mxu0 0.0
    %1328 = vmatprep.subr.mxu0 0.0
    %1329 = vmatpush2.msra.mxu0 0.0
    %1330 = vmatprep.subr.mxu0 0.0
    %1331 = vmatpush2.msra.mxu0 0.0
    %1332 = vmatprep.subr.mxu0 0.0
    %1333 = vmatpush2.msra.mxu0 0.0
    %1334 = vmatprep.subr.mxu0 0.0
    %1335 = vmatpush2.msra.mxu0 0.0
    %1336 = vmatprep.subr.mxu0 0.0
    %1337 = vmatpush2.msra.mxu0 0.0
    %1338 = vmatprep.mubr.f32.mxu0 0.0
    %1339 = vmatmul.mubr.f32.gmra.mxu0 %v1272
    %v1340 = vpop.f32.mrf.mxu0
    %v1341 = vadd.f32 0.0, %v1340
    %v1342 = vpop.f32.mrf.mxu0
    %1343 = vdwg.mxu0
    %v1345 = vsel %vm517, %v1192, 0
    %1347 = vmatprep.subr.mxu0 0.0
    %1348 = vmatpush1.msra.mxu0 0.0
    %1349 = vmatprep.subr.mxu0 0.0
    %1350 = vmatpush1.msra.mxu0 0.0
    %1351 = vmatprep.subr.mxu0 0.0
    %1352 = vmatpush1.msra.mxu0 0.0
    %1353 = vmatprep.subr.mxu0 0.0
    %1354 = vmatpush1.msra.mxu0 0.0
    %1355 = vmatprep.subr.mxu0 0.0
    %1356 = vmatpush1.msra.mxu0 0.0
    %1357 = vmatprep.subr.mxu0 0.0
    %1358 = vmatpush1.msra.mxu0 0.0
    %1359 = vmatprep.subr.mxu0 0.0
    %1360 = vmatpush1.msra.mxu0 0.0
    %1361 = vmatprep.subr.mxu0 0.0
    %1362 = vmatpush1.msra.mxu0 0.0
    %1363 = vmatprep.subr.mxu0 0.0
    %1364 = vmatpush1.msra.mxu0 0.0
    %1365 = vmatprep.subr.mxu0 0.0
    %1366 = vmatpush1.msra.mxu0 0.0
    %1367 = vmatprep.subr.mxu0 0.0
    %1368 = vmatpush1.msra.mxu0 0.0
    %1369 = vmatprep.subr.mxu0 0.0
    %1370 = vmatpush1.msra.mxu0 0.0
    %1371 = vmatprep.subr.mxu0 0.0
    %1372 = vmatpush1.msra.mxu0 0.0
    %1373 = vmatprep.subr.mxu0 0.0
    %1374 = vmatpush1.msra.mxu0 0.0
    %1375 = vmatprep.subr.mxu0 0.0
    %1376 = vmatpush1.msra.mxu0 0.0
    %1377 = vmatprep.subr.mxu0 0.0
    %1378 = vmatpush1.msra.mxu0 %v500
    %1379 = vmatprep.subr.mxu0 0.0
    %1380 = vmatpush2.msra.mxu0 0.0
    %1381 = vmatprep.subr.mxu0 0.0
    %1382 = vmatpush2.msra.mxu0 0.0
    %1383 = vmatprep.subr.mxu0 0.0
    %1384 = vmatpush2.msra.mxu0 0.0
    %1385 = vmatprep.subr.mxu0 0.0
    %1386 = vmatpush2.msra.mxu0 0.0
    %1387 = vmatprep.subr.mxu0 0.0
    %1388 = vmatpush2.msra.mxu0 0.0
    %1389 = vmatprep.subr.mxu0 0.0
    %1390 = vmatpush2.msra.mxu0 0.0
    %1391 = vmatprep.subr.mxu0 0.0
    %1392 = vmatpush2.msra.mxu0 0.0
    %1393 = vmatprep.subr.mxu0 0.0
    %1394 = vmatpush2.msra.mxu0 0.0
    %1395 = vmatprep.subr.mxu0 0.0
    %1396 = vmatpush2.msra.mxu0 0.0
    %1397 = vmatprep.subr.mxu0 0.0
    %1398 = vmatpush2.msra.mxu0 0.0
    %1399 = vmatprep.subr.mxu0 0.0
    %1400 = vmatpush2.msra.mxu0 0.0
    %1401 = vmatprep.subr.mxu0 0.0
    %1402 = vmatpush2.msra.mxu0 0.0
    %1403 = vmatprep.subr.mxu0 0.0
    %1404 = vmatpush2.msra.mxu0 0.0
    %1405 = vmatprep.subr.mxu0 0.0
    %1406 = vmatpush2.msra.mxu0 0.0
    %1407 = vmatprep.subr.mxu0 0.0
    %1408 = vmatpush2.msra.mxu0 0.0
    %1409 = vmatprep.subr.mxu0 0.0
    %1410 = vmatpush2.msra.mxu0 0.0
    %1411 = vmatprep.mubr.f32.mxu0 0.0
    %1412 = vmatmul.mubr.f32.gmra.mxu0 %v1345
    %v1413 = vpop.f32.mrf.mxu0
    %v1414 = vadd.f32 0.0, %v1413
    %v1415 = vpop.f32.mrf.mxu0
    %1416 = vdwg.mxu0
    %v1418 = vsel %vm517, %v1193, 0
    %1420 = vmatprep.subr.mxu0 0.0
    %1421 = vmatpush1.msra.mxu0 0.0
    %1422 = vmatprep.subr.mxu0 0.0
    %1423 = vmatpush1.msra.mxu0 0.0
    %1424 = vmatprep.subr.mxu0 0.0
    %1425 = vmatpush1.msra.mxu0 0.0
    %1426 = vmatprep.subr.mxu0 0.0
    %1427 = vmatpush1.msra.mxu0 0.0
    %1428 = vmatprep.subr.mxu0 0.0
    %1429 = vmatpush1.msra.mxu0 0.0
    %1430 = vmatprep.subr.mxu0 0.0
    %1431 = vmatpush1.msra.mxu0 0.0
    %1432 = vmatprep.subr.mxu0 0.0
    %1433 = vmatpush1.msra.mxu0 0.0
    %1434 = vmatprep.subr.mxu0 0.0
    %1435 = vmatpush1.msra.mxu0 0.0
    %1436 = vmatprep.subr.mxu0 0.0
    %1437 = vmatpush1.msra.mxu0 0.0
    %1438 = vmatprep.subr.mxu0 0.0
    %1439 = vmatpush1.msra.mxu0 0.0
    %1440 = vmatprep.subr.mxu0 0.0
    %1441 = vmatpush1.msra.mxu0 0.0
    %1442 = vmatprep.subr.mxu0 0.0
    %1443 = vmatpush1.msra.mxu0 0.0
    %1444 = vmatprep.subr.mxu0 0.0
    %1445 = vmatpush1.msra.mxu0 0.0
    %1446 = vmatprep.subr.mxu0 0.0
    %1447 = vmatpush1.msra.mxu0 0.0
    %1448 = vmatprep.subr.mxu0 0.0
    %1449 = vmatpush1.msra.mxu0 0.0
    %1450 = vmatprep.subr.mxu0 0.0
    %1451 = vmatpush1.msra.mxu0 %v502
    %1452 = vmatprep.subr.mxu0 0.0
    %1453 = vmatpush2.msra.mxu0 0.0
    %1454 = vmatprep.subr.mxu0 0.0
    %1455 = vmatpush2.msra.mxu0 0.0
    %1456 = vmatprep.subr.mxu0 0.0
    %1457 = vmatpush2.msra.mxu0 0.0
    %1458 = vmatprep.subr.mxu0 0.0
    %1459 = vmatpush2.msra.mxu0 0.0
    %1460 = vmatprep.subr.mxu0 0.0
    %1461 = vmatpush2.msra.mxu0 0.0
    %1462 = vmatprep.subr.mxu0 0.0
    %1463 = vmatpush2.msra.mxu0 0.0
    %1464 = vmatprep.subr.mxu0 0.0
    %1465 = vmatpush2.msra.mxu0 0.0
    %1466 = vmatprep.subr.mxu0 0.0
    %1467 = vmatpush2.msra.mxu0 0.0
    %1468 = vmatprep.subr.mxu0 0.0
    %1469 = vmatpush2.msra.mxu0 0.0
    %1470 = vmatprep.subr.mxu0 0.0
    %1471 = vmatpush2.msra.mxu0 0.0
    %1472 = vmatprep.subr.mxu0 0.0
    %1473 = vmatpush2.msra.mxu0 0.0
    %1474 = vmatprep.subr.mxu0 0.0
    %1475 = vmatpush2.msra.mxu0 0.0
    %1476 = vmatprep.subr.mxu0 0.0
    %1477 = vmatpush2.msra.mxu0 0.0
    %1478 = vmatprep.subr.mxu0 0.0
    %1479 = vmatpush2.msra.mxu0 0.0
    %1480 = vmatprep.subr.mxu0 0.0
    %1481 = vmatpush2.msra.mxu0 0.0
    %1482 = vmatprep.subr.mxu0 0.0
    %1483 = vmatpush2.msra.mxu0 0.0
    %1484 = vmatprep.mubr.f32.mxu0 0.0
    %1485 = vmatmul.mubr.f32.gmra.mxu0 %v1418
    %v1486 = vpop.f32.mrf.mxu0
    %v1487 = vadd.f32 0.0, %v1486
    %v1488 = vpop.f32.mrf.mxu0
    %1489 = vdwg.mxu0
    %v1491 = vsel %vm517, %v1194, 0
    %1493 = vmatprep.subr.mxu0 0.0
    %1494 = vmatpush1.msra.mxu0 0.0
    %1495 = vmatprep.subr.mxu0 0.0
    %1496 = vmatpush1.msra.mxu0 0.0
    %1497 = vmatprep.subr.mxu0 0.0
    %1498 = vmatpush1.msra.mxu0 0.0
    %1499 = vmatprep.subr.mxu0 0.0
    %1500 = vmatpush1.msra.mxu0 0.0
    %1501 = vmatprep.subr.mxu0 0.0
    %1502 = vmatpush1.msra.mxu0 0.0
    %1503 = vmatprep.subr.mxu0 0.0
    %1504 = vmatpush1.msra.mxu0 0.0
    %1505 = vmatprep.subr.mxu0 0.0
    %1506 = vmatpush1.msra.mxu0 0.0
    %1507 = vmatprep.subr.mxu0 0.0
    %1508 = vmatpush1.msra.mxu0 0.0
    %1509 = vmatprep.subr.mxu0 0.0
    %1510 = vmatpush1.msra.mxu0 0.0
    %1511 = vmatprep.subr.mxu0 0.0
    %1512 = vmatpush1.msra.mxu0 0.0
    %1513 = vmatprep.subr.mxu0 0.0
    %1514 = vmatpush1.msra.mxu0 0.0
    %1515 = vmatprep.subr.mxu0 0.0
    %1516 = vmatpush1.msra.mxu0 0.0
    %1517 = vmatprep.subr.mxu0 0.0
    %1518 = vmatpush1.msra.mxu0 0.0
    %1519 = vmatprep.subr.mxu0 0.0
    %1520 = vmatpush1.msra.mxu0 0.0
    %1521 = vmatprep.subr.mxu0 0.0
    %1522 = vmatpush1.msra.mxu0 0.0
    %1523 = vmatprep.subr.mxu0 0.0
    %1524 = vmatpush1.msra.mxu0 %v506
    %1525 = vmatprep.subr.mxu0 0.0
    %1526 = vmatpush2.msra.mxu0 0.0
    %1527 = vmatprep.subr.mxu0 0.0
    %1528 = vmatpush2.msra.mxu0 0.0
    %1529 = vmatprep.subr.mxu0 0.0
    %1530 = vmatpush2.msra.mxu0 0.0
    %1531 = vmatprep.subr.mxu0 0.0
    %1532 = vmatpush2.msra.mxu0 0.0
    %1533 = vmatprep.subr.mxu0 0.0
    %1534 = vmatpush2.msra.mxu0 0.0
    %1535 = vmatprep.subr.mxu0 0.0
    %1536 = vmatpush2.msra.mxu0 0.0
    %1537 = vmatprep.subr.mxu0 0.0
    %1538 = vmatpush2.msra.mxu0 0.0
    %1539 = vmatprep.subr.mxu0 0.0
    %1540 = vmatpush2.msra.mxu0 0.0
    %1541 = vmatprep.subr.mxu0 0.0
    %1542 = vmatpush2.msra.mxu0 0.0
    %1543 = vmatprep.subr.mxu0 0.0
    %1544 = vmatpush2.msra.mxu0 0.0
    %1545 = vmatprep.subr.mxu0 0.0
    %1546 = vmatpush2.msra.mxu0 0.0
    %1547 = vmatprep.subr.mxu0 0.0
    %1548 = vmatpush2.msra.mxu0 0.0
    %1549 = vmatprep.subr.mxu0 0.0
    %1550 = vmatpush2.msra.mxu0 0.0
    %1551 = vmatprep.subr.mxu0 0.0
    %1552 = vmatpush2.msra.mxu0 0.0
    %1553 = vmatprep.subr.mxu0 0.0
    %1554 = vmatpush2.msra.mxu0 0.0
    %1555 = vmatprep.subr.mxu0 0.0
    %1556 = vmatpush2.msra.mxu0 0.0
    %1557 = vmatprep.mubr.f32.mxu0 0.0
    %1558 = vmatmul.mubr.f32.gmra.mxu0 %v1491
    %v1559 = vpop.f32.mrf.mxu0
    %v1560 = vadd.f32 0.0, %v1559
    %v1561 = vpop.f32.mrf.mxu0
    %1562 = vdwg.mxu0
    %v1564 = vsel %vm517, %v1195, 0
    %1566 = vmatprep.subr.mxu0 0.0
    %1567 = vmatpush1.msra.mxu0 0.0
    %1568 = vmatprep.subr.mxu0 0.0
    %1569 = vmatpush1.msra.mxu0 0.0
    %1570 = vmatprep.subr.mxu0 0.0
    %1571 = vmatpush1.msra.mxu0 0.0
    %1572 = vmatprep.subr.mxu0 0.0
    %1573 = vmatpush1.msra.mxu0 0.0
    %1574 = vmatprep.subr.mxu0 0.0
    %1575 = vmatpush1.msra.mxu0 0.0
    %1576 = vmatprep.subr.mxu0 0.0
    %1577 = vmatpush1.msra.mxu0 0.0
    %1578 = vmatprep.subr.mxu0 0.0
    %1579 = vmatpush1.msra.mxu0 0.0
    %1580 = vmatprep.subr.mxu0 0.0
    %1581 = vmatpush1.msra.mxu0 0.0
    %1582 = vmatprep.subr.mxu0 0.0
    %1583 = vmatpush1.msra.mxu0 0.0
    %1584 = vmatprep.subr.mxu0 0.0
    %1585 = vmatpush1.msra.mxu0 0.0
    %1586 = vmatprep.subr.mxu0 0.0
    %1587 = vmatpush1.msra.mxu0 0.0
    %1588 = vmatprep.subr.mxu0 0.0
    %1589 = vmatpush1.msra.mxu0 0.0
    %1590 = vmatprep.subr.mxu0 0.0
    %1591 = vmatpush1.msra.mxu0 0.0
    %1592 = vmatprep.subr.mxu0 0.0
    %1593 = vmatpush1.msra.mxu0 0.0
    %1594 = vmatprep.subr.mxu0 0.0
    %1595 = vmatpush1.msra.mxu0 0.0
    %1596 = vmatprep.subr.mxu0 0.0
    %1597 = vmatpush1.msra.mxu0 %v508
    %1598 = vmatprep.subr.mxu0 0.0
    %1599 = vmatpush2.msra.mxu0 0.0
    %1600 = vmatprep.subr.mxu0 0.0
    %1601 = vmatpush2.msra.mxu0 0.0
    %1602 = vmatprep.subr.mxu0 0.0
    %1603 = vmatpush2.msra.mxu0 0.0
    %1604 = vmatprep.subr.mxu0 0.0
    %1605 = vmatpush2.msra.mxu0 0.0
    %1606 = vmatprep.subr.mxu0 0.0
    %1607 = vmatpush2.msra.mxu0 0.0
    %1608 = vmatprep.subr.mxu0 0.0
    %1609 = vmatpush2.msra.mxu0 0.0
    %1610 = vmatprep.subr.mxu0 0.0
    %1611 = vmatpush2.msra.mxu0 0.0
    %1612 = vmatprep.subr.mxu0 0.0
    %1613 = vmatpush2.msra.mxu0 0.0
    %1614 = vmatprep.subr.mxu0 0.0
    %1615 = vmatpush2.msra.mxu0 0.0
    %1616 = vmatprep.subr.mxu0 0.0
    %1617 = vmatpush2.msra.mxu0 0.0
    %1618 = vmatprep.subr.mxu0 0.0
    %1619 = vmatpush2.msra.mxu0 0.0
    %1620 = vmatprep.subr.mxu0 0.0
    %1621 = vmatpush2.msra.mxu0 0.0
    %1622 = vmatprep.subr.mxu0 0.0
    %1623 = vmatpush2.msra.mxu0 0.0
    %1624 = vmatprep.subr.mxu0 0.0
    %1625 = vmatpush2.msra.mxu0 0.0
    %1626 = vmatprep.subr.mxu0 0.0
    %1627 = vmatpush2.msra.mxu0 0.0
    %1628 = vmatprep.subr.mxu0 0.0
    %1629 = vmatpush2.msra.mxu0 0.0
    %1630 = vmatprep.mubr.f32.mxu0 0.0
    %1631 = vmatmul.mubr.f32.gmra.mxu0 %v1564
    %v1632 = vpop.f32.mrf.mxu0
    %v1633 = vadd.f32 0.0, %v1632
    %v1634 = vpop.f32.mrf.mxu0
    %1635 = vdwg.mxu0
    %v1637 = vsel %vm517, %v1196, 0
    %1639 = vmatprep.subr.mxu0 0.0
    %1640 = vmatpush1.msra.mxu0 0.0
    %1641 = vmatprep.subr.mxu0 0.0
    %1642 = vmatpush1.msra.mxu0 0.0
    %1643 = vmatprep.subr.mxu0 0.0
    %1644 = vmatpush1.msra.mxu0 0.0
    %1645 = vmatprep.subr.mxu0 0.0
    %1646 = vmatpush1.msra.mxu0 0.0
    %1647 = vmatprep.subr.mxu0 0.0
    %1648 = vmatpush1.msra.mxu0 0.0
    %1649 = vmatprep.subr.mxu0 0.0
    %1650 = vmatpush1.msra.mxu0 0.0
    %1651 = vmatprep.subr.mxu0 0.0
    %1652 = vmatpush1.msra.mxu0 0.0
    %1653 = vmatprep.subr.mxu0 0.0
    %1654 = vmatpush1.msra.mxu0 0.0
    %1655 = vmatprep.subr.mxu0 0.0
    %1656 = vmatpush1.msra.mxu0 0.0
    %1657 = vmatprep.subr.mxu0 0.0
    %1658 = vmatpush1.msra.mxu0 0.0
    %1659 = vmatprep.subr.mxu0 0.0
    %1660 = vmatpush1.msra.mxu0 0.0
    %1661 = vmatprep.subr.mxu0 0.0
    %1662 = vmatpush1.msra.mxu0 0.0
    %1663 = vmatprep.subr.mxu0 0.0
    %1664 = vmatpush1.msra.mxu0 0.0
    %1665 = vmatprep.subr.mxu0 0.0
    %1666 = vmatpush1.msra.mxu0 0.0
    %1667 = vmatprep.subr.mxu0 0.0
    %1668 = vmatpush1.msra.mxu0 0.0
    %1669 = vmatprep.subr.mxu0 0.0
    %1670 = vmatpush1.msra.mxu0 %v512
    %1671 = vmatprep.subr.mxu0 0.0
    %1672 = vmatpush2.msra.mxu0 0.0
    %1673 = vmatprep.subr.mxu0 0.0
    %1674 = vmatpush2.msra.mxu0 0.0
    %1675 = vmatprep.subr.mxu0 0.0
    %1676 = vmatpush2.msra.mxu0 0.0
    %1677 = vmatprep.subr.mxu0 0.0
    %1678 = vmatpush2.msra.mxu0 0.0
    %1679 = vmatprep.subr.mxu0 0.0
    %1680 = vmatpush2.msra.mxu0 0.0
    %1681 = vmatprep.subr.mxu0 0.0
    %1682 = vmatpush2.msra.mxu0 0.0
    %1683 = vmatprep.subr.mxu0 0.0
    %1684 = vmatpush2.msra.mxu0 0.0
    %1685 = vmatprep.subr.mxu0 0.0
    %1686 = vmatpush2.msra.mxu0 0.0
    %1687 = vmatprep.subr.mxu0 0.0
    %1688 = vmatpush2.msra.mxu0 0.0
    %1689 = vmatprep.subr.mxu0 0.0
    %1690 = vmatpush2.msra.mxu0 0.0
    %1691 = vmatprep.subr.mxu0 0.0
    %1692 = vmatpush2.msra.mxu0 0.0
    %1693 = vmatprep.subr.mxu0 0.0
    %1694 = vmatpush2.msra.mxu0 0.0
    %1695 = vmatprep.subr.mxu0 0.0
    %1696 = vmatpush2.msra.mxu0 0.0
    %1697 = vmatprep.subr.mxu0 0.0
    %1698 = vmatpush2.msra.mxu0 0.0
    %1699 = vmatprep.subr.mxu0 0.0
    %1700 = vmatpush2.msra.mxu0 0.0
    %1701 = vmatprep.subr.mxu0 0.0
    %1702 = vmatpush2.msra.mxu0 0.0
    %1703 = vmatprep.mubr.f32.mxu0 0.0
    %1704 = vmatmul.mubr.f32.gmra.mxu0 %v1637
    %v1705 = vpop.f32.mrf.mxu0
    %v1706 = vadd.f32 0.0, %v1705
    %v1707 = vpop.f32.mrf.mxu0
    %1708 = vdwg.mxu0
    %v1710 = vsel %vm517, %v1197, 0
    %1712 = vmatprep.subr.mxu0 0.0
    %1713 = vmatpush1.msra.mxu0 0.0
    %1714 = vmatprep.subr.mxu0 0.0
    %1715 = vmatpush1.msra.mxu0 0.0
    %1716 = vmatprep.subr.mxu0 0.0
    %1717 = vmatpush1.msra.mxu0 0.0
    %1718 = vmatprep.subr.mxu0 0.0
    %1719 = vmatpush1.msra.mxu0 0.0
    %1720 = vmatprep.subr.mxu0 0.0
    %1721 = vmatpush1.msra.mxu0 0.0
    %1722 = vmatprep.subr.mxu0 0.0
    %1723 = vmatpush1.msra.mxu0 0.0
    %1724 = vmatprep.subr.mxu0 0.0
    %1725 = vmatpush1.msra.mxu0 0.0
    %1726 = vmatprep.subr.mxu0 0.0
    %1727 = vmatpush1.msra.mxu0 0.0
    %1728 = vmatprep.subr.mxu0 0.0
    %1729 = vmatpush1.msra.mxu0 0.0
    %1730 = vmatprep.subr.mxu0 0.0
    %1731 = vmatpush1.msra.mxu0 0.0
    %1732 = vmatprep.subr.mxu0 0.0
    %1733 = vmatpush1.msra.mxu0 0.0
    %1734 = vmatprep.subr.mxu0 0.0
    %1735 = vmatpush1.msra.mxu0 0.0
    %1736 = vmatprep.subr.mxu0 0.0
    %1737 = vmatpush1.msra.mxu0 0.0
    %1738 = vmatprep.subr.mxu0 0.0
    %1739 = vmatpush1.msra.mxu0 0.0
    %1740 = vmatprep.subr.mxu0 0.0
    %1741 = vmatpush1.msra.mxu0 0.0
    %1742 = vmatprep.subr.mxu0 0.0
    %1743 = vmatpush1.msra.mxu0 %v514
    %1744 = vmatprep.subr.mxu0 0.0
    %1745 = vmatpush2.msra.mxu0 0.0
    %1746 = vmatprep.subr.mxu0 0.0
    %1747 = vmatpush2.msra.mxu0 0.0
    %1748 = vmatprep.subr.mxu0 0.0
    %1749 = vmatpush2.msra.mxu0 0.0
    %1750 = vmatprep.subr.mxu0 0.0
    %1751 = vmatpush2.msra.mxu0 0.0
    %1752 = vmatprep.subr.mxu0 0.0
    %1753 = vmatpush2.msra.mxu0 0.0
    %1754 = vmatprep.subr.mxu0 0.0
    %1755 = vmatpush2.msra.mxu0 0.0
    %1756 = vmatprep.subr.mxu0 0.0
    %1757 = vmatpush2.msra.mxu0 0.0
    %1758 = vmatprep.subr.mxu0 0.0
    %1759 = vmatpush2.msra.mxu0 0.0
    %1760 = vmatprep.subr.mxu0 0.0
    %1761 = vmatpush2.msra.mxu0 0.0
    %1762 = vmatprep.subr.mxu0 0.0
    %1763 = vmatpush2.msra.mxu0 0.0
    %1764 = vmatprep.subr.mxu0 0.0
    %1765 = vmatpush2.msra.mxu0 0.0
    %1766 = vmatprep.subr.mxu0 0.0
    %1767 = vmatpush2.msra.mxu0 0.0
    %1768 = vmatprep.subr.mxu0 0.0
    %1769 = vmatpush2.msra.mxu0 0.0
    %1770 = vmatprep.subr.mxu0 0.0
    %1771 = vmatpush2.msra.mxu0 0.0
    %1772 = vmatprep.subr.mxu0 0.0
    %1773 = vmatpush2.msra.mxu0 0.0
    %1774 = vmatprep.subr.mxu0 0.0
    %1775 = vmatpush2.msra.mxu0 0.0
    %1776 = vmatprep.mubr.f32.mxu0 0.0
    %1777 = vmatmul.mubr.f32.gmra.mxu0 %v1710
    %v1778 = vpop.f32.mrf.mxu0
    %v1779 = vadd.f32 0.0, %v1778
    %v1780 = vpop.f32.mrf.mxu0
    %1781 = vdwg.mxu0
    %1784 = vrot.lane.b32.xlu0 %v1414, 8
    %v1785 = vpop.permute.xlu0 %1784
    %1786 = vrot.lane.b32.xlu0 %v1487, 8
    %v1787 = vpop.permute.xlu0 %1786
    %1792 = vrot.lane.b32.xlu0 %v1560, 16
    %v1793 = vpop.permute.xlu0 %1792
    %1794 = vrot.lane.b32.xlu0 %v1633, 16
    %v1795 = vpop.permute.xlu0 %1794
    %1800 = vrot.lane.b32.xlu0 %v1706, 24
    %v1801 = vpop.permute.xlu0 %1800
    %1802 = vrot.lane.b32.xlu0 %v1779, 24
    %v1803 = vpop.permute.xlu0 %1802
    %v1806 = vsel %vm517, %v1268, %v1785
    %v1807 = vsel %vm517, %v1341, %v1787
    %vm1808 = vcmask 130048
    %v1809 = vsel %vm1808, %v1806, %v1793
    %v1810 = vsel %vm1808, %v1807, %v1795
    %vm1811 = vcmask 195584
    %v1812 = vsel %vm1811, %v1809, %v1801
    %v1813 = vsel %vm1811, %v1810, %v1803
    %v1814 = vld [vmem:[#allocation8] sm:$0xff]
    %v1815 = vld [vmem:[#allocation8 + $0x8] sm:$0xff]
    %v1816 = vld [vmem:[#allocation8 + $0x10] sm:$0xff]
    %v1817 = vld [vmem:[#allocation8 + $0x18] sm:$0xff]
    %1822 = vrot.lane.b32.xlu0 %v1814, 32
    %v1823 = vpop.permute.xlu0 %1822
    %1824 = vrot.lane.b32.xlu0 %v1815, 32
    %v1825 = vpop.permute.xlu0 %1824
    %1826 = vrot.lane.b32.xlu0 %v1816, 32
    %v1827 = vpop.permute.xlu0 %1826
    %1828 = vrot.lane.b32.xlu0 %v1817, 32
    %v1829 = vpop.permute.xlu0 %1828
    %1834 = vrot.lane.b32.xlu0 %v108, 64
    %v1835 = vpop.permute.xlu0 %1834
    %v1838 = vsel %vm77, %v1812, 0
    %v1841 = vsel %vm77, %v1813, 0
    %1843 = vmatprep.subr.mxu0 0.0
    %1844 = vmatpush1.msra.mxu0 0.0
    %1845 = vmatprep.subr.mxu0 0.0
    %1846 = vmatpush1.msra.mxu0 0.0
    %1847 = vmatprep.subr.mxu0 0.0
    %1848 = vmatpush1.msra.mxu0 0.0
    %1849 = vmatprep.subr.mxu0 0.0
    %1850 = vmatpush1.msra.mxu0 0.0
    %1851 = vmatprep.subr.mxu0 0.0
    %1852 = vmatpush1.msra.mxu0 0.0
    %1853 = vmatprep.subr.mxu0 0.0
    %1854 = vmatpush1.msra.mxu0 0.0
    %1855 = vmatprep.subr.mxu0 0.0
    %1856 = vmatpush1.msra.mxu0 0.0
    %1857 = vmatprep.subr.mxu0 0.0
    %1858 = vmatpush1.msra.mxu0 0.0
    %1859 = vmatprep.subr.mxu0 0.0
    %1860 = vmatpush1.msra.mxu0 0.0
    %1861 = vmatprep.subr.mxu0 0.0
    %1862 = vmatpush1.msra.mxu0 0.0
    %1863 = vmatprep.subr.mxu0 0.0
    %1864 = vmatpush1.msra.mxu0 0.0
    %1865 = vmatprep.subr.mxu0 0.0
    %1866 = vmatpush1.msra.mxu0 0.0
    %1867 = vmatprep.subr.mxu0 0.0
    %1868 = vmatpush1.msra.mxu0 %v1829
    %1869 = vmatprep.subr.mxu0 0.0
    %1870 = vmatpush1.msra.mxu0 %v1827
    %1871 = vmatprep.subr.mxu0 0.0
    %1872 = vmatpush1.msra.mxu0 %v1825
    %1873 = vmatprep.subr.mxu0 0.0
    %1874 = vmatpush1.msra.mxu0 %v1823
    %1875 = vmatprep.subr.mxu0 0.0
    %1876 = vmatpush2.msra.mxu0 0.0
    %1877 = vmatprep.subr.mxu0 0.0
    %1878 = vmatpush2.msra.mxu0 0.0
    %1879 = vmatprep.subr.mxu0 0.0
    %1880 = vmatpush2.msra.mxu0 0.0
    %1881 = vmatprep.subr.mxu0 0.0
    %1882 = vmatpush2.msra.mxu0 0.0
    %1883 = vmatprep.subr.mxu0 0.0
    %1884 = vmatpush2.msra.mxu0 0.0
    %1885 = vmatprep.subr.mxu0 0.0
    %1886 = vmatpush2.msra.mxu0 0.0
    %1887 = vmatprep.subr.mxu0 0.0
    %1888 = vmatpush2.msra.mxu0 0.0
    %1889 = vmatprep.subr.mxu0 0.0
    %1890 = vmatpush2.msra.mxu0 0.0
    %1891 = vmatprep.subr.mxu0 0.0
    %1892 = vmatpush2.msra.mxu0 0.0
    %1893 = vmatprep.subr.mxu0 0.0
    %1894 = vmatpush2.msra.mxu0 0.0
    %1895 = vmatprep.subr.mxu0 0.0
    %1896 = vmatpush2.msra.mxu0 0.0
    %1897 = vmatprep.subr.mxu0 0.0
    %1898 = vmatpush2.msra.mxu0 0.0
    %1899 = vmatprep.subr.mxu0 0.0
    %1900 = vmatpush2.msra.mxu0 0.0
    %1901 = vmatprep.subr.mxu0 0.0
    %1902 = vmatpush2.msra.mxu0 0.0
    %1903 = vmatprep.subr.mxu0 0.0
    %1904 = vmatpush2.msra.mxu0 0.0
    %1905 = vmatprep.subr.mxu0 0.0
    %1906 = vmatpush2.msra.mxu0 0.0
    %1907 = vmatprep.mubr.f32.mxu0 0.0
    %1908 = vmatmul.mubr.f32.gmra.mxu0 %v1838
    %v1909 = vpop.f32.mrf.mxu0
    %v1910 = vadd.f32 %v1835, %v1909
    %v1911 = vpop.f32.mrf.mxu0
    %1912 = vmatprep.mubr.f32.mxu0 0.0
    %1913 = vmatmul.mubr.f32.gmra.mxu0 %v1841
    %v1914 = vpop.f32.mrf.mxu0
    %v1915 = vadd.f32 %v1835, %v1914
    %v1916 = vpop.f32.mrf.mxu0
    %1917 = vdwg.mxu0
    %v1918 = vadd.f32 %v1910, %v75
    %v1919 = vadd.f32 %v1915, %v76
    %1920 = vst.msk [vmem:[#allocation10] sm:$0xff] %vm77, %v1918
    %1921 = vst.msk [vmem:[#allocation10 + $0x8] sm:$0xff] %vm77, %v1919
    // Predicated region
    $region34: #{attention_block.1} parent=1 // pred_check
      _
    $region35: #{attention_block.1} parent=1 // pred_check_branch
      %1923 = sbr.rel (0) target = $region37
    $region36: #{attention_block.1} parent=1 // pred_region
      %s1925 = ssub.s32 256, 256
      %1926 = vsyncadd [#allocation4], %s1925
      %s1927 = sshll.u32 [#allocation10], 4
      %s1928 = int_to_ptr.vmem [resolvable:$true] %s1927
      %1933 = dma.vmem_to_hbm [thread:$0]  %s1928, 256, %s4, [#allocation4], 128, 128, 8
    $region37: #{attention_block.1} parent=1 // pred_fallthru
      _
    // Predicated region
    $region38: #{attention_block.1} parent=1 // pred_check
      _
    $region39: #{attention_block.1} parent=1 // pred_check_branch
      %1935 = sbr.rel (0) target = $region41
    $region40: #{attention_block.1} parent=1 // pred_region
      %1936 = dma.done [#allocation4], 256
    $region41: #{attention_block.1} parent=1 // pred_fallthru
      _
    %1937 = vsyncpa [#allocation3], 1
    %1938 = vsyncpa [#allocation6], 1
    %1939 = vsyncpa [#allocation9], 1
    %1940 = vsyncpa [#allocation4], 1

</llo_original>
